<compile_context>
chip_gen: v6e
topology: v6e:2x2x1
jax: 0.10.0
libtpu: 0.0.40
codegen_flags: <defaults>
</compile_context>

<pallas_src>
import math

import jax
import jax.numpy as jnp
from jax import lax
from jax.experimental import pallas as pl
from jax.experimental.pallas import tpu as pltpu

EPS = 1e-6        # c2nl LayerNorm eps
NEG_INF = -1e18   # additive mask value (== masked_fill value in f32)


def _layer_norm(x, gamma, beta, d):
    # c2nl LayerNorm: mean/std over last dim; torch .std() is unbiased (N-1),
    # and the denominator is (std + eps), not sqrt(var + eps).
    mean = jnp.mean(x, axis=-1, keepdims=True)
    var = jnp.sum((x - mean) ** 2, axis=-1, keepdims=True) * (1.0 / (d - 1))
    std = jnp.sqrt(var)
    # Exact division (per correctness review); approx reciprocal only in softmax.
    return gamma * ((x - mean) / (std + EPS)) + beta


def make_kernel(heads, d_k, d_v):
    def kernel(xq_ref, xkv_ref, bias_ref,
               wq_ref, bq_ref, wk_ref, bk_ref, wv_ref, bv_ref, wo_ref, bo_ref,
               ln1_g_ref, ln1_b_ref, ffn_ln_g_ref, ffn_ln_b_ref,
               w1_ref, b1_ref, w2_ref, b2_ref,
               out_ref, attn_ref, ctx_ref):
        xq = xq_ref[0]                              # (TQ, D) f32: queries + residual
        xq16 = xq.astype(jnp.bfloat16)
        xkv16 = xkv_ref[0].astype(jnp.bfloat16)     # (L, D): keys/values source
        d_model = xq.shape[-1]

        # Full-width projections: one bf16 MXU matmul per Q/K/V with output
        # width H*dk / H*dv (instead of per-head N=dk matmuls).
        q_all = jnp.dot(xq16, wq_ref[...], preferred_element_type=jnp.float32) + bq_ref[...]
        k_all = jnp.dot(xkv16, wk_ref[...], preferred_element_type=jnp.float32) + bk_ref[...]
        v_all = jnp.dot(xkv16, wv_ref[...], preferred_element_type=jnp.float32) + bv_ref[...]

        bias = bias_ref[0]                          # (1, L) or (TQ, L) additive mask

        # Static per-head lane slices of the fused projections. Each head's
        # scores/probs are consumed within its iteration (stored to attn_ref)
        # and its context is written to the VMEM scratch at a static lane
        # offset, so nothing large stays live across heads. A heads grid axis
        # would conflict with the full-width fused QKV projection above.
        for h in range(heads):
            q = q_all[:, h * d_k:(h + 1) * d_k]
            k = k_all[:, h * d_k:(h + 1) * d_k]
            v = v_all[:, h * d_v:(h + 1) * d_v]

            # scores = q @ k^T without materializing k.T (contract last dims).
            scores = lax.dot_general(q, k, (((1,), (1,)), ((), ())),
                                     preferred_element_type=jnp.float32)
            scores = scores + bias                  # broadcast over query rows

            # numerically-stable softmax in f32; approx reciprocal = EUP slot.
            scores = scores - jnp.max(scores, axis=-1, keepdims=True)
            e = jnp.exp(scores)
            p = e * pl.reciprocal(jnp.sum(e, axis=-1, keepdims=True), approx=True)
            attn_ref[0, h, :, :] = p.astype(attn_ref.dtype)

            ctx_ref[:, h * d_v:(h + 1) * d_v] = jnp.dot(
                p.astype(jnp.bfloat16), v.astype(jnp.bfloat16),
                preferred_element_type=jnp.float32)

        # Single output projection with full contraction depth K = H*dv.
        attn_out = jnp.dot(ctx_ref[...].astype(jnp.bfloat16), wo_ref[...],
                           preferred_element_type=jnp.float32) + bo_ref[...]

        # dropout(context) is identity at inference.
        y = _layer_norm(attn_out + xq, ln1_g_ref[...], ln1_b_ref[...], d_model)

        # PositionwiseFeedForward: pre-LN, relu, residual (dropout == identity).
        z = _layer_norm(y, ffn_ln_g_ref[...], ffn_ln_b_ref[...], d_model)
        inter = jnp.maximum(
            jnp.dot(z.astype(jnp.bfloat16), w1_ref[...],
                    preferred_element_type=jnp.float32) + b1_ref[...], 0.0)
        ffn = jnp.dot(inter.astype(jnp.bfloat16), w2_ref[...],
                      preferred_element_type=jnp.float32) + b2_ref[...]
        out_ref[0] = ffn + y

    return kernel


def prepare_params(params, d_k):
    """Fold the 1/sqrt(d_k) query scale into Wq/bq and cast matmul weights to
    bf16 (f32 accumulation in-kernel). Head layout is the torch column layout
    (head h occupies columns [h*dk, (h+1)*dk)), so no per-head splitting is
    needed for the fused full-width projections."""
    scale = 1.0 / math.sqrt(d_k)
    bf16 = jnp.bfloat16
    return {
        "wq": (params["wq"] * scale).astype(bf16),
        "bq": params["bq"] * scale,
        "wk": params["wk"].astype(bf16), "bk": params["bk"],
        "wv": params["wv"].astype(bf16), "bv": params["bv"],
        "wo": params["wo"].astype(bf16), "bo": params["bo"],
        "ln1_g": params["ln1_g"], "ln1_b": params["ln1_b"],
        "ffn_ln_g": params["ffn_ln_g"], "ffn_ln_b": params["ffn_ln_b"],
        "w1": params["w1"].astype(bf16), "b1": params["b1"],
        "w2": params["w2"].astype(bf16), "b2": params["b2"],
    }


def _vmem_limit_bytes():
    # ~75% of physical VMEM: ~96 MiB on v5e/v6e (128 MiB), ~48 MiB on v7x (64 MiB).
    try:
        cap = int(pltpu.get_tpu_info().vmem_capacity_bytes)
    except Exception:
        cap = 64 * 1024 * 1024          # conservative fallback (v7x-sized)
    return int(min(cap * 3 // 4, 110 * 1024 * 1024))


def _choose_q_tile(L):
    # Flash-style query tiling keeps the (1, H, TQ, L) attention block bounded
    # (mandatory on v7x's 64 MiB VMEM at realistic L); a no-op at small L.
    if L <= 128:
        return L
    if L % 128 == 0:
        return 128
    return L  # TODO(synk): ragged L > 128 would need masked partial query tiles.


def transformer_encoder_layer(x, mask, params, heads, d_k, d_v, d_ff,
                              attn_dtype=jnp.float32):
    """mask: (B, 1, L) key-padding form (preferred; L x less DMA) or (B, L, L);
    1.0 == masked. attn_dtype=jnp.bfloat16 halves the attn-prob HBM writeback."""
    B, L, D = x.shape
    TQ = _choose_q_tile(L)
    NQ = L // TQ

    kernel = make_kernel(heads, d_k, d_v)
    kp = prepare_params(params, d_k)

    # Additive attention bias (0 / -1e18). -1e18 in f32 absorbs any finite
    # score, so this matches masked_fill (incl. the fully-masked-row case).
    if mask.ndim == 2:
        mask = mask[:, None, :]
    attn_bias = mask.astype(jnp.float32) * jnp.float32(NEG_INF)
    key_padding = attn_bias.shape[1] == 1
    bias_rows = 1 if key_padding else TQ
    bias_index = (lambda b, qi: (b, 0, 0)) if key_padding else (lambda b, qi: (b, qi, 0))

    def full_spec(arr):
        n = arr.ndim
        # NOTE: pipeline_mode=pl.Buffered(1) would halve weight VMEM (constant
        # index_map needs no double-buffer); left off for lowering compatibility.
        return pl.BlockSpec(arr.shape, lambda b, qi, n=n: (0,) * n)

    weight_order = ["wq", "bq", "wk", "bk", "wv", "bv", "wo", "bo",
                    "ln1_g", "ln1_b", "ffn_ln_g", "ffn_ln_b",
                    "w1", "b1", "w2", "b2"]

    in_specs = [
        pl.BlockSpec((1, TQ, D), lambda b, qi: (b, qi, 0)),   # x: query tile + residual
        pl.BlockSpec((1, L, D), lambda b, qi: (b, 0, 0)),     # x: full length for K/V
        pl.BlockSpec((1, bias_rows, L), bias_index),          # additive mask bias
    ] + [full_spec(kp[k]) for k in weight_order]

    out_shapes = (jax.ShapeDtypeStruct((B, L, D), jnp.float32),
                  jax.ShapeDtypeStruct((B, heads, L, L), attn_dtype))
    out_specs = (pl.BlockSpec((1, TQ, D), lambda b, qi: (b, qi, 0)),
                 pl.BlockSpec((1, heads, TQ, L), lambda b, qi: (b, 0, qi, 0)))

    fn = pl.pallas_call(
        kernel,
        out_shape=out_shapes,
        grid=(B, NQ),
        in_specs=in_specs,
        out_specs=out_specs,
        scratch_shapes=[pltpu.VMEM((TQ, heads * d_v), jnp.float32)],
        compiler_params=pltpu.CompilerParams(
            dimension_semantics=("parallel", "parallel"),  # B * NQ independent steps
            vmem_limit_bytes=_vmem_limit_bytes(),
        ),
    )
    args = [x, x, attn_bias] + [kp[k] for k in weight_order]
    return fn(*args)


def init_params(key, d_model, heads, d_k, d_v, d_ff):
    ks = jax.random.split(key, 8)
    s = 0.1

    def rnd(k, shape):
        return jax.random.normal(k, shape, dtype=jnp.float32) * s

    return {
        "wq": rnd(ks[0], (d_model, heads * d_k)),
        "bq": jnp.zeros((1, heads * d_k), jnp.float32),
        "wk": rnd(ks[1], (d_model, heads * d_k)),
        "bk": jnp.zeros((1, heads * d_k), jnp.float32),
        "wv": rnd(ks[2], (d_model, heads * d_v)),
        "bv": jnp.zeros((1, heads * d_v), jnp.float32),
        "wo": rnd(ks[3], (heads * d_v, d_model)),
        "bo": jnp.zeros((1, d_model), jnp.float32),
        "ln1_g": jnp.ones((1, d_model), jnp.float32),
        "ln1_b": jnp.zeros((1, d_model), jnp.float32),
        "ffn_ln_g": jnp.ones((1, d_model), jnp.float32),
        "ffn_ln_b": jnp.zeros((1, d_model), jnp.float32),
        "w1": rnd(ks[4], (d_model, d_ff)),
        "b1": jnp.zeros((1, d_ff), jnp.float32),
        "w2": rnd(ks[5], (d_ff, d_model)),
        "b2": jnp.zeros((1, d_model), jnp.float32),
    }


def reference(x, mask, params, heads, d_k, d_v):
    """Pure-JAX f32 reference matching the torch module (inference)."""
    B, L, D = x.shape
    scale = 1.0 / math.sqrt(d_k)

    def ln(v, g, b):
        mean = v.mean(-1, keepdims=True)
        var = ((v - mean) ** 2).sum(-1, keepdims=True) / (D - 1)
        return g * (v - mean) / (jnp.sqrt(var) + EPS) + b

    q = (x @ params["wq"] + params["bq"]).reshape(B, L, heads, d_k).transpose(0, 2, 1, 3) * scale
    k = (x @ params["wk"] + params["bk"]).reshape(B, L, heads, d_k).transpose(0, 2, 1, 3)
    v = (x @ params["wv"] + params["bv"]).reshape(B, L, heads, d_v).transpose(0, 2, 1, 3)
    s = jnp.einsum("bhqd,bhkd->bhqk", q, k)
    if mask.ndim == 2:
        mask = mask[:, None, :]
    s = jnp.where(mask[:, None] > 0.0, NEG_INF, s)
    p = jax.nn.softmax(s, axis=-1)
    ctx = jnp.einsum("bhqk,bhkd->bhqd", p, v).transpose(0, 2, 1, 3).reshape(B, L, heads * d_v)
    attn_out = ctx @ params["wo"] + params["bo"]
    y = ln(attn_out + x, params["ln1_g"], params["ln1_b"])
    z = ln(y, params["ffn_ln_g"], params["ffn_ln_b"])
    ffn = jnp.maximum(z @ params["w1"] + params["b1"], 0.0) @ params["w2"] + params["b2"]
    return ffn + y, p


if __name__ == "__main__":
    B, L = 2, 8
    d_model, heads, d_k, d_v, d_ff = 32, 4, 8, 8, 64

    key = jax.random.PRNGKey(0)
    k_x, k_p = jax.random.split(key)

    x = jax.random.normal(k_x, (B, L, d_model), dtype=jnp.float32)

    # Key-padding mask (the form the c2nl encoder actually passes): batch 0 is
    # full length, batch 1 is padded after position 5.  1.0 == masked.
    lengths = jnp.array([L, 5], dtype=jnp.int32)
    col = jnp.arange(L)[None, None, :]                               # (1, 1, L)
    mask = (col >= lengths[:, None, None]).astype(jnp.float32)       # (B, 1, L)

    params = init_params(k_p, d_model, heads, d_k, d_v, d_ff)

    out, attn_per_head = transformer_encoder_layer(
        x, mask, params, heads, d_k, d_v, d_ff, attn_dtype=jnp.float32)
    jax.block_until_ready((out, attn_per_head))

    assert out.shape == (B, L, d_model)
    assert attn_per_head.shape == (B, heads, L, L)

    # Loose-tolerance check vs. f32 reference (kernel uses bf16 matmuls with f32
    # accumulation and an approximate softmax reciprocal).
    ref_out, ref_attn = reference(x, mask, params, heads, d_k, d_v)
    assert bool(jnp.allclose(out, ref_out, atol=5e-2, rtol=5e-2))
    assert bool(jnp.allclose(attn_per_head, ref_attn, atol=5e-2, rtol=5e-2))

    print("KERNEL_OK")
</pallas_src>

<mosaic_0001>
module attributes {stable_mosaic.version = 11 : i64} {
  func.func @kernel(%arg0: i32, %arg1: i32, %arg2: memref<1x8x32xf32, #tpu.memory_space<vmem>>, %arg3: memref<1x8x32xf32, #tpu.memory_space<vmem>>, %arg4: memref<1x1x8xf32, #tpu.memory_space<vmem>>, %arg5: memref<32x32xbf16, #tpu.memory_space<vmem>>, %arg6: memref<1x32xf32, #tpu.memory_space<vmem>>, %arg7: memref<32x32xbf16, #tpu.memory_space<vmem>>, %arg8: memref<1x32xf32, #tpu.memory_space<vmem>>, %arg9: memref<32x32xbf16, #tpu.memory_space<vmem>>, %arg10: memref<1x32xf32, #tpu.memory_space<vmem>>, %arg11: memref<32x32xbf16, #tpu.memory_space<vmem>>, %arg12: memref<1x32xf32, #tpu.memory_space<vmem>>, %arg13: memref<1x32xf32, #tpu.memory_space<vmem>>, %arg14: memref<1x32xf32, #tpu.memory_space<vmem>>, %arg15: memref<1x32xf32, #tpu.memory_space<vmem>>, %arg16: memref<1x32xf32, #tpu.memory_space<vmem>>, %arg17: memref<32x64xbf16, #tpu.memory_space<vmem>>, %arg18: memref<1x64xf32, #tpu.memory_space<vmem>>, %arg19: memref<64x32xbf16, #tpu.memory_space<vmem>>, %arg20: memref<1x32xf32, #tpu.memory_space<vmem>>, %arg21: memref<1x8x32xf32, #tpu.memory_space<vmem>>, %arg22: memref<1x4x8x8xf32, #tpu.memory_space<vmem>>, %arg23: memref<8x32xf32, #tpu.memory_space<vmem>>) attributes {dimension_semantics = [#tpu.dimension_semantics<parallel>, #tpu.dimension_semantics<parallel>], iteration_bounds = array<i64: 2, 1>, scalar_prefetch = 0 : i64, scratch_operands = 1 : i64, tpu.core_type = #tpu.core_type<tc>, window_params = [{transform_indices = @transform_0, window_bounds = array<i64: 1, 8, 32>}, {transform_indices = @transform_1, window_bounds = array<i64: 1, 8, 32>}, {transform_indices = @transform_2, window_bounds = array<i64: 1, 1, 8>}, {pipeline_mode = #tpu.pipeline_mode<synchronous>, transform_indices = @transform_3, window_bounds = array<i64: 32, 32>}, {pipeline_mode = #tpu.pipeline_mode<synchronous>, transform_indices = @transform_4, window_bounds = array<i64: 1, 32>}, {pipeline_mode = #tpu.pipeline_mode<synchronous>, transform_indices = @transform_5, window_bounds = array<i64: 32, 32>}, {pipeline_mode = #tpu.pipeline_mode<synchronous>, transform_indices = @transform_6, window_bounds = array<i64: 1, 32>}, {pipeline_mode = #tpu.pipeline_mode<synchronous>, transform_indices = @transform_7, window_bounds = array<i64: 32, 32>}, {pipeline_mode = #tpu.pipeline_mode<synchronous>, transform_indices = @transform_8, window_bounds = array<i64: 1, 32>}, {pipeline_mode = #tpu.pipeline_mode<synchronous>, transform_indices = @transform_9, window_bounds = array<i64: 32, 32>}, {pipeline_mode = #tpu.pipeline_mode<synchronous>, transform_indices = @transform_10, window_bounds = array<i64: 1, 32>}, {pipeline_mode = #tpu.pipeline_mode<synchronous>, transform_indices = @transform_11, window_bounds = array<i64: 1, 32>}, {pipeline_mode = #tpu.pipeline_mode<synchronous>, transform_indices = @transform_12, window_bounds = array<i64: 1, 32>}, {pipeline_mode = #tpu.pipeline_mode<synchronous>, transform_indices = @transform_13, window_bounds = array<i64: 1, 32>}, {pipeline_mode = #tpu.pipeline_mode<synchronous>, transform_indices = @transform_14, window_bounds = array<i64: 1, 32>}, {pipeline_mode = #tpu.pipeline_mode<synchronous>, transform_indices = @transform_15, window_bounds = array<i64: 32, 64>}, {pipeline_mode = #tpu.pipeline_mode<synchronous>, transform_indices = @transform_16, window_bounds = array<i64: 1, 64>}, {pipeline_mode = #tpu.pipeline_mode<synchronous>, transform_indices = @transform_17, window_bounds = array<i64: 64, 32>}, {pipeline_mode = #tpu.pipeline_mode<synchronous>, transform_indices = @transform_18, window_bounds = array<i64: 1, 32>}, {transform_indices = @transform_19, window_bounds = array<i64: 1, 8, 32>}, {transform_indices = @transform_20, window_bounds = array<i64: 1, 4, 8, 8>}]} {
    %c0 = arith.constant 0 : index
    %c0_0 = arith.constant 0 : index
    %c0_1 = arith.constant 0 : index
    %0 = vector.load %arg2[%c0, %c0_0, %c0_1] : memref<1x8x32xf32, #tpu.memory_space<vmem>>, vector<1x8x32xf32>
    %1 = vector.shape_cast %0 : vector<1x8x32xf32> to vector<8x32xf32>
    %2 = arith.truncf %1 : vector<8x32xf32> to vector<8x32xbf16>
    %c0_2 = arith.constant 0 : index
    %c0_3 = arith.constant 0 : index
    %c0_4 = arith.constant 0 : index
    %3 = vector.load %arg3[%c0_2, %c0_3, %c0_4] : memref<1x8x32xf32, #tpu.memory_space<vmem>>, vector<1x8x32xf32>
    %4 = vector.shape_cast %3 : vector<1x8x32xf32> to vector<8x32xf32>
    %5 = arith.truncf %4 : vector<8x32xf32> to vector<8x32xbf16>
    %c0_5 = arith.constant 0 : index
    %c0_6 = arith.constant 0 : index
    %6 = vector.load %arg5[%c0_5, %c0_6] : memref<32x32xbf16, #tpu.memory_space<vmem>>, vector<32x32xbf16>
    %cst = arith.constant dense<0.000000e+00> : vector<8x32xf32>
    %7 = tpu.matmul %2, %6, %cst {dimension_numbers = #tpu.dot_dimension_numbers<[1], [0], [0], [1], [0, 0, 1, 1], [], []>} : vector<8x32xbf16>, vector<32x32xbf16>, vector<8x32xf32> -> vector<8x32xf32>
    %c0_7 = arith.constant 0 : index
    %c0_8 = arith.constant 0 : index
    %8 = vector.load %arg6[%c0_7, %c0_8] : memref<1x32xf32, #tpu.memory_space<vmem>>, vector<1x32xf32>
    %9 = vector.broadcast %8 : vector<1x32xf32> to vector<8x32xf32>
    %10 = arith.addf %7, %9 : vector<8x32xf32>
    %c0_9 = arith.constant 0 : index
    %c0_10 = arith.constant 0 : index
    %11 = vector.load %arg7[%c0_9, %c0_10] : memref<32x32xbf16, #tpu.memory_space<vmem>>, vector<32x32xbf16>
    %cst_11 = arith.constant dense<0.000000e+00> : vector<8x32xf32>
    %12 = tpu.matmul %5, %11, %cst_11 {dimension_numbers = #tpu.dot_dimension_numbers<[1], [0], [0], [1], [0, 0, 1, 1], [], []>} : vector<8x32xbf16>, vector<32x32xbf16>, vector<8x32xf32> -> vector<8x32xf32>
    %c0_12 = arith.constant 0 : index
    %c0_13 = arith.constant 0 : index
    %13 = vector.load %arg8[%c0_12, %c0_13] : memref<1x32xf32, #tpu.memory_space<vmem>>, vector<1x32xf32>
    %14 = vector.broadcast %13 : vector<1x32xf32> to vector<8x32xf32>
    %15 = arith.addf %12, %14 : vector<8x32xf32>
    %c0_14 = arith.constant 0 : index
    %c0_15 = arith.constant 0 : index
    %16 = vector.load %arg9[%c0_14, %c0_15] : memref<32x32xbf16, #tpu.memory_space<vmem>>, vector<32x32xbf16>
    %cst_16 = arith.constant dense<0.000000e+00> : vector<8x32xf32>
    %17 = tpu.matmul %5, %16, %cst_16 {dimension_numbers = #tpu.dot_dimension_numbers<[1], [0], [0], [1], [0, 0, 1, 1], [], []>} : vector<8x32xbf16>, vector<32x32xbf16>, vector<8x32xf32> -> vector<8x32xf32>
    %c0_17 = arith.constant 0 : index
    %c0_18 = arith.constant 0 : index
    %18 = vector.load %arg10[%c0_17, %c0_18] : memref<1x32xf32, #tpu.memory_space<vmem>>, vector<1x32xf32>
    %19 = vector.broadcast %18 : vector<1x32xf32> to vector<8x32xf32>
    %20 = arith.addf %17, %19 : vector<8x32xf32>
    %c0_19 = arith.constant 0 : index
    %c0_20 = arith.constant 0 : index
    %c0_21 = arith.constant 0 : index
    %21 = vector.load %arg4[%c0_19, %c0_20, %c0_21] : memref<1x1x8xf32, #tpu.memory_space<vmem>>, vector<1x1x8xf32>
    %22 = vector.shape_cast %21 : vector<1x1x8xf32> to vector<1x8xf32>
    %23 = vector.extract_strided_slice %10 {offsets = [0, 0], sizes = [8, 8], strides = [1, 1]} : vector<8x32xf32> to vector<8x8xf32>
    %24 = vector.extract_strided_slice %15 {offsets = [0, 0], sizes = [8, 8], strides = [1, 1]} : vector<8x32xf32> to vector<8x8xf32>
    %25 = vector.extract_strided_slice %20 {offsets = [0, 0], sizes = [8, 8], strides = [1, 1]} : vector<8x32xf32> to vector<8x8xf32>
    %cst_22 = arith.constant dense<0.000000e+00> : vector<8x8xf32>
    %26 = tpu.matmul %23, %24, %cst_22 {dimension_numbers = #tpu.dot_dimension_numbers<[1], [1], [0], [0], [0, 0, 1, 0], [], []>} : vector<8x8xf32>, vector<8x8xf32>, vector<8x8xf32> -> vector<8x8xf32>
    %27 = vector.broadcast %22 : vector<1x8xf32> to vector<8x8xf32>
    %28 = arith.addf %26, %27 : vector<8x8xf32>
    %cst_23 = arith.constant dense<0xFF800000> : vector<8xf32>
    %29 = vector.multi_reduction <maximumf>, %28, %cst_23 [1] : vector<8x8xf32> to vector<8xf32>
    %30 = vector.shape_cast %29 : vector<8xf32> to vector<8x1xf32>
    %31 = vector.broadcast %30 : vector<8x1xf32> to vector<8x8xf32>
    %32 = arith.subf %28, %31 : vector<8x8xf32>
    %33 = math.exp %32 : vector<8x8xf32>
    %cst_24 = arith.constant dense<0.000000e+00> : vector<8xf32>
    %34 = vector.multi_reduction <add>, %33, %cst_24 [1] : vector<8x8xf32> to vector<8xf32>
    %35 = vector.shape_cast %34 : vector<8xf32> to vector<8x1xf32>
    %36 = tpu.reciprocal %35 {approx = true} : vector<8x1xf32> -> vector<8x1xf32>
    %37 = vector.broadcast %36 : vector<8x1xf32> to vector<8x8xf32>
    %38 = arith.mulf %33, %37 : vector<8x8xf32>
    %c0_25 = arith.constant 0 : index
    %c0_26 = arith.constant 0 : index
    %c0_27 = arith.constant 0 : index
    %c0_28 = arith.constant 0 : index
    %39 = vector.load %arg22[%c0_25, %c0_26, %c0_27, %c0_28] : memref<1x4x8x8xf32, #tpu.memory_space<vmem>>, vector<1x1x8x8xf32>
    %40 = vector.shape_cast %39 : vector<1x1x8x8xf32> to vector<8x8xf32>
    %41 = vector.shape_cast %38 : vector<8x8xf32> to vector<1x1x8x8xf32>
    tpu.vector_store %arg22[%c0_25, %c0_26, %c0_27, %c0_28], %41 {strides = array<i32>} : memref<1x4x8x8xf32, #tpu.memory_space<vmem>>, vector<1x1x8x8xf32>,
    %42 = arith.truncf %38 : vector<8x8xf32> to vector<8x8xbf16>
    %43 = arith.truncf %25 : vector<8x8xf32> to vector<8x8xbf16>
    %cst_29 = arith.constant dense<0.000000e+00> : vector<8x8xf32>
    %44 = tpu.matmul %42, %43, %cst_29 {dimension_numbers = #tpu.dot_dimension_numbers<[1], [0], [0], [1], [0, 0, 1, 1], [], []>} : vector<8x8xbf16>, vector<8x8xbf16>, vector<8x8xf32> -> vector<8x8xf32>
    %c0_30 = arith.constant 0 : index
    %c0_31 = arith.constant 0 : index
    %45 = vector.load %arg23[%c0_30, %c0_31] : memref<8x32xf32, #tpu.memory_space<vmem>>, vector<8x8xf32>
    tpu.vector_store %arg23[%c0_30, %c0_31], %44 {strides = array<i32>} : memref<8x32xf32, #tpu.memory_space<vmem>>, vector<8x8xf32>,
    %46 = vector.extract_strided_slice %10 {offsets = [0, 8], sizes = [8, 8], strides = [1, 1]} : vector<8x32xf32> to vector<8x8xf32>
    %47 = vector.extract_strided_slice %15 {offsets = [0, 8], sizes = [8, 8], strides = [1, 1]} : vector<8x32xf32> to vector<8x8xf32>
    %48 = vector.extract_strided_slice %20 {offsets = [0, 8], sizes = [8, 8], strides = [1, 1]} : vector<8x32xf32> to vector<8x8xf32>
    %cst_32 = arith.constant dense<0.000000e+00> : vector<8x8xf32>
    %49 = tpu.matmul %46, %47, %cst_32 {dimension_numbers = #tpu.dot_dimension_numbers<[1], [1], [0], [0], [0, 0, 1, 0], [], []>} : vector<8x8xf32>, vector<8x8xf32>, vector<8x8xf32> -> vector<8x8xf32>
    %50 = vector.broadcast %22 : vector<1x8xf32> to vector<8x8xf32>
    %51 = arith.addf %49, %50 : vector<8x8xf32>
    %cst_33 = arith.constant dense<0xFF800000> : vector<8xf32>
    %52 = vector.multi_reduction <maximumf>, %51, %cst_33 [1] : vector<8x8xf32> to vector<8xf32>
    %53 = vector.shape_cast %52 : vector<8xf32> to vector<8x1xf32>
    %54 = vector.broadcast %53 : vector<8x1xf32> to vector<8x8xf32>
    %55 = arith.subf %51, %54 : vector<8x8xf32>
    %56 = math.exp %55 : vector<8x8xf32>
    %cst_34 = arith.constant dense<0.000000e+00> : vector<8xf32>
    %57 = vector.multi_reduction <add>, %56, %cst_34 [1] : vector<8x8xf32> to vector<8xf32>
    %58 = vector.shape_cast %57 : vector<8xf32> to vector<8x1xf32>
    %59 = tpu.reciprocal %58 {approx = true} : vector<8x1xf32> -> vector<8x1xf32>
    %60 = vector.broadcast %59 : vector<8x1xf32> to vector<8x8xf32>
    %61 = arith.mulf %56, %60 : vector<8x8xf32>
    %c0_35 = arith.constant 0 : index
    %c1 = arith.constant 1 : index
    %c0_36 = arith.constant 0 : index
    %c0_37 = arith.constant 0 : index
    %62 = vector.load %arg22[%c0_35, %c1, %c0_36, %c0_37] : memref<1x4x8x8xf32, #tpu.memory_space<vmem>>, vector<1x1x8x8xf32>
    %63 = vector.shape_cast %62 : vector<1x1x8x8xf32> to vector<8x8xf32>
    %64 = vector.shape_cast %61 : vector<8x8xf32> to vector<1x1x8x8xf32>
    tpu.vector_store %arg22[%c0_35, %c1, %c0_36, %c0_37], %64 {strides = array<i32>} : memref<1x4x8x8xf32, #tpu.memory_space<vmem>>, vector<1x1x8x8xf32>,
    %65 = arith.truncf %61 : vector<8x8xf32> to vector<8x8xbf16>
    %66 = arith.truncf %48 : vector<8x8xf32> to vector<8x8xbf16>
    %cst_38 = arith.constant dense<0.000000e+00> : vector<8x8xf32>
    %67 = tpu.matmul %65, %66, %cst_38 {dimension_numbers = #tpu.dot_dimension_numbers<[1], [0], [0], [1], [0, 0, 1, 1], [], []>} : vector<8x8xbf16>, vector<8x8xbf16>, vector<8x8xf32> -> vector<8x8xf32>
    %c0_39 = arith.constant 0 : index
    %c8 = arith.constant 8 : index
    %68 = vector.load %arg23[%c0_39, %c8] : memref<8x32xf32, #tpu.memory_space<vmem>>, vector<8x8xf32>
    tpu.vector_store %arg23[%c0_39, %c8], %67 {strides = array<i32>} : memref<8x32xf32, #tpu.memory_space<vmem>>, vector<8x8xf32>,
    %69 = vector.extract_strided_slice %10 {offsets = [0, 16], sizes = [8, 8], strides = [1, 1]} : vector<8x32xf32> to vector<8x8xf32>
    %70 = vector.extract_strided_slice %15 {offsets = [0, 16], sizes = [8, 8], strides = [1, 1]} : vector<8x32xf32> to vector<8x8xf32>
    %71 = vector.extract_strided_slice %20 {offsets = [0, 16], sizes = [8, 8], strides = [1, 1]} : vector<8x32xf32> to vector<8x8xf32>
    %cst_40 = arith.constant dense<0.000000e+00> : vector<8x8xf32>
    %72 = tpu.matmul %69, %70, %cst_40 {dimension_numbers = #tpu.dot_dimension_numbers<[1], [1], [0], [0], [0, 0, 1, 0], [], []>} : vector<8x8xf32>, vector<8x8xf32>, vector<8x8xf32> -> vector<8x8xf32>
    %73 = vector.broadcast %22 : vector<1x8xf32> to vector<8x8xf32>
    %74 = arith.addf %72, %73 : vector<8x8xf32>
    %cst_41 = arith.constant dense<0xFF800000> : vector<8xf32>
    %75 = vector.multi_reduction <maximumf>, %74, %cst_41 [1] : vector<8x8xf32> to vector<8xf32>
    %76 = vector.shape_cast %75 : vector<8xf32> to vector<8x1xf32>
    %77 = vector.broadcast %76 : vector<8x1xf32> to vector<8x8xf32>
    %78 = arith.subf %74, %77 : vector<8x8xf32>
    %79 = math.exp %78 : vector<8x8xf32>
    %cst_42 = arith.constant dense<0.000000e+00> : vector<8xf32>
    %80 = vector.multi_reduction <add>, %79, %cst_42 [1] : vector<8x8xf32> to vector<8xf32>
    %81 = vector.shape_cast %80 : vector<8xf32> to vector<8x1xf32>
    %82 = tpu.reciprocal %81 {approx = true} : vector<8x1xf32> -> vector<8x1xf32>
    %83 = vector.broadcast %82 : vector<8x1xf32> to vector<8x8xf32>
    %84 = arith.mulf %79, %83 : vector<8x8xf32>
    %c0_43 = arith.constant 0 : index
    %c2 = arith.constant 2 : index
    %c0_44 = arith.constant 0 : index
    %c0_45 = arith.constant 0 : index
    %85 = vector.load %arg22[%c0_43, %c2, %c0_44, %c0_45] : memref<1x4x8x8xf32, #tpu.memory_space<vmem>>, vector<1x1x8x8xf32>
    %86 = vector.shape_cast %85 : vector<1x1x8x8xf32> to vector<8x8xf32>
    %87 = vector.shape_cast %84 : vector<8x8xf32> to vector<1x1x8x8xf32>
    tpu.vector_store %arg22[%c0_43, %c2, %c0_44, %c0_45], %87 {strides = array<i32>} : memref<1x4x8x8xf32, #tpu.memory_space<vmem>>, vector<1x1x8x8xf32>,
    %88 = arith.truncf %84 : vector<8x8xf32> to vector<8x8xbf16>
    %89 = arith.truncf %71 : vector<8x8xf32> to vector<8x8xbf16>
    %cst_46 = arith.constant dense<0.000000e+00> : vector<8x8xf32>
    %90 = tpu.matmul %88, %89, %cst_46 {dimension_numbers = #tpu.dot_dimension_numbers<[1], [0], [0], [1], [0, 0, 1, 1], [], []>} : vector<8x8xbf16>, vector<8x8xbf16>, vector<8x8xf32> -> vector<8x8xf32>
    %c0_47 = arith.constant 0 : index
    %c16 = arith.constant 16 : index
    %91 = vector.load %arg23[%c0_47, %c16] : memref<8x32xf32, #tpu.memory_space<vmem>>, vector<8x8xf32>
    tpu.vector_store %arg23[%c0_47, %c16], %90 {strides = array<i32>} : memref<8x32xf32, #tpu.memory_space<vmem>>, vector<8x8xf32>,
    %92 = vector.extract_strided_slice %10 {offsets = [0, 24], sizes = [8, 8], strides = [1, 1]} : vector<8x32xf32> to vector<8x8xf32>
    %93 = vector.extract_strided_slice %15 {offsets = [0, 24], sizes = [8, 8], strides = [1, 1]} : vector<8x32xf32> to vector<8x8xf32>
    %94 = vector.extract_strided_slice %20 {offsets = [0, 24], sizes = [8, 8], strides = [1, 1]} : vector<8x32xf32> to vector<8x8xf32>
    %cst_48 = arith.constant dense<0.000000e+00> : vector<8x8xf32>
    %95 = tpu.matmul %92, %93, %cst_48 {dimension_numbers = #tpu.dot_dimension_numbers<[1], [1], [0], [0], [0, 0, 1, 0], [], []>} : vector<8x8xf32>, vector<8x8xf32>, vector<8x8xf32> -> vector<8x8xf32>
    %96 = vector.broadcast %22 : vector<1x8xf32> to vector<8x8xf32>
    %97 = arith.addf %95, %96 : vector<8x8xf32>
    %cst_49 = arith.constant dense<0xFF800000> : vector<8xf32>
    %98 = vector.multi_reduction <maximumf>, %97, %cst_49 [1] : vector<8x8xf32> to vector<8xf32>
    %99 = vector.shape_cast %98 : vector<8xf32> to vector<8x1xf32>
    %100 = vector.broadcast %99 : vector<8x1xf32> to vector<8x8xf32>
    %101 = arith.subf %97, %100 : vector<8x8xf32>
    %102 = math.exp %101 : vector<8x8xf32>
    %cst_50 = arith.constant dense<0.000000e+00> : vector<8xf32>
    %103 = vector.multi_reduction <add>, %102, %cst_50 [1] : vector<8x8xf32> to vector<8xf32>
    %104 = vector.shape_cast %103 : vector<8xf32> to vector<8x1xf32>
    %105 = tpu.reciprocal %104 {approx = true} : vector<8x1xf32> -> vector<8x1xf32>
    %106 = vector.broadcast %105 : vector<8x1xf32> to vector<8x8xf32>
    %107 = arith.mulf %102, %106 : vector<8x8xf32>
    %c0_51 = arith.constant 0 : index
    %c3 = arith.constant 3 : index
    %c0_52 = arith.constant 0 : index
    %c0_53 = arith.constant 0 : index
    %108 = vector.load %arg22[%c0_51, %c3, %c0_52, %c0_53] : memref<1x4x8x8xf32, #tpu.memory_space<vmem>>, vector<1x1x8x8xf32>
    %109 = vector.shape_cast %108 : vector<1x1x8x8xf32> to vector<8x8xf32>
    %110 = vector.shape_cast %107 : vector<8x8xf32> to vector<1x1x8x8xf32>
    tpu.vector_store %arg22[%c0_51, %c3, %c0_52, %c0_53], %110 {strides = array<i32>} : memref<1x4x8x8xf32, #tpu.memory_space<vmem>>, vector<1x1x8x8xf32>,
    %111 = arith.truncf %107 : vector<8x8xf32> to vector<8x8xbf16>
    %112 = arith.truncf %94 : vector<8x8xf32> to vector<8x8xbf16>
    %cst_54 = arith.constant dense<0.000000e+00> : vector<8x8xf32>
    %113 = tpu.matmul %111, %112, %cst_54 {dimension_numbers = #tpu.dot_dimension_numbers<[1], [0], [0], [1], [0, 0, 1, 1], [], []>} : vector<8x8xbf16>, vector<8x8xbf16>, vector<8x8xf32> -> vector<8x8xf32>
    %c0_55 = arith.constant 0 : index
    %c24 = arith.constant 24 : index
    %114 = vector.load %arg23[%c0_55, %c24] : memref<8x32xf32, #tpu.memory_space<vmem>>, vector<8x8xf32>
    tpu.vector_store %arg23[%c0_55, %c24], %113 {strides = array<i32>} : memref<8x32xf32, #tpu.memory_space<vmem>>, vector<8x8xf32>,
    %c0_56 = arith.constant 0 : index
    %c0_57 = arith.constant 0 : index
    %115 = vector.load %arg23[%c0_56, %c0_57] : memref<8x32xf32, #tpu.memory_space<vmem>>, vector<8x32xf32>
    %116 = arith.truncf %115 : vector<8x32xf32> to vector<8x32xbf16>
    %c0_58 = arith.constant 0 : index
    %c0_59 = arith.constant 0 : index
    %117 = vector.load %arg11[%c0_58, %c0_59] : memref<32x32xbf16, #tpu.memory_space<vmem>>, vector<32x32xbf16>
    %cst_60 = arith.constant dense<0.000000e+00> : vector<8x32xf32>
    %118 = tpu.matmul %116, %117, %cst_60 {dimension_numbers = #tpu.dot_dimension_numbers<[1], [0], [0], [1], [0, 0, 1, 1], [], []>} : vector<8x32xbf16>, vector<32x32xbf16>, vector<8x32xf32> -> vector<8x32xf32>
    %c0_61 = arith.constant 0 : index
    %c0_62 = arith.constant 0 : index
    %119 = vector.load %arg12[%c0_61, %c0_62] : memref<1x32xf32, #tpu.memory_space<vmem>>, vector<1x32xf32>
    %120 = vector.broadcast %119 : vector<1x32xf32> to vector<8x32xf32>
    %121 = arith.addf %118, %120 : vector<8x32xf32>
    %122 = arith.addf %121, %1 : vector<8x32xf32>
    %c0_63 = arith.constant 0 : index
    %c0_64 = arith.constant 0 : index
    %123 = vector.load %arg13[%c0_63, %c0_64] : memref<1x32xf32, #tpu.memory_space<vmem>>, vector<1x32xf32>
    %c0_65 = arith.constant 0 : index
    %c0_66 = arith.constant 0 : index
    %124 = vector.load %arg14[%c0_65, %c0_66] : memref<1x32xf32, #tpu.memory_space<vmem>>, vector<1x32xf32>
    %cst_67 = arith.constant dense<0.000000e+00> : vector<8xf32>
    %125 = vector.multi_reduction <add>, %122, %cst_67 [1] : vector<8x32xf32> to vector<8xf32>
    %126 = vector.shape_cast %125 : vector<8xf32> to vector<8x1xf32>
    %cst_68 = arith.constant 3.200000e+01 : f32
    %127 = vector.broadcast %cst_68 : f32 to vector<8x1xf32>
    %128 = arith.divf %126, %127 : vector<8x1xf32>
    %129 = vector.broadcast %128 : vector<8x1xf32> to vector<8x32xf32>
    %130 = arith.subf %122, %129 : vector<8x32xf32>
    %131 = arith.mulf %130, %130 : vector<8x32xf32>
    %cst_69 = arith.constant dense<0.000000e+00> : vector<8xf32>
    %132 = vector.multi_reduction <add>, %131, %cst_69 [1] : vector<8x32xf32> to vector<8xf32>
    %133 = vector.shape_cast %132 : vector<8xf32> to vector<8x1xf32>
    %cst_70 = arith.constant 0.0322580636 : f32
    %134 = vector.broadcast %cst_70 : f32 to vector<8x1xf32>
    %135 = arith.mulf %133, %134 : vector<8x1xf32>
    %136 = math.sqrt %135 : vector<8x1xf32>
    %137 = vector.broadcast %128 : vector<8x1xf32> to vector<8x32xf32>
    %138 = arith.subf %122, %137 : vector<8x32xf32>
    %cst_71 = arith.constant 9.99999997E-7 : f32
    %139 = vector.broadcast %cst_71 : f32 to vector<8x1xf32>
    %140 = arith.addf %136, %139 : vector<8x1xf32>
    %141 = vector.broadcast %140 : vector<8x1xf32> to vector<8x32xf32>
    %142 = arith.divf %138, %141 : vector<8x32xf32>
    %143 = vector.broadcast %123 : vector<1x32xf32> to vector<8x32xf32>
    %144 = arith.mulf %143, %142 : vector<8x32xf32>
    %145 = vector.broadcast %124 : vector<1x32xf32> to vector<8x32xf32>
    %146 = arith.addf %144, %145 : vector<8x32xf32>
    %c0_72 = arith.constant 0 : index
    %c0_73 = arith.constant 0 : index
    %147 = vector.load %arg15[%c0_72, %c0_73] : memref<1x32xf32, #tpu.memory_space<vmem>>, vector<1x32xf32>
    %c0_74 = arith.constant 0 : index
    %c0_75 = arith.constant 0 : index
    %148 = vector.load %arg16[%c0_74, %c0_75] : memref<1x32xf32, #tpu.memory_space<vmem>>, vector<1x32xf32>
    %cst_76 = arith.constant dense<0.000000e+00> : vector<8xf32>
    %149 = vector.multi_reduction <add>, %146, %cst_76 [1] : vector<8x32xf32> to vector<8xf32>
    %150 = vector.shape_cast %149 : vector<8xf32> to vector<8x1xf32>
    %cst_77 = arith.constant 3.200000e+01 : f32
    %151 = vector.broadcast %cst_77 : f32 to vector<8x1xf32>
    %152 = arith.divf %150, %151 : vector<8x1xf32>
    %153 = vector.broadcast %152 : vector<8x1xf32> to vector<8x32xf32>
    %154 = arith.subf %146, %153 : vector<8x32xf32>
    %155 = arith.mulf %154, %154 : vector<8x32xf32>
    %cst_78 = arith.constant dense<0.000000e+00> : vector<8xf32>
    %156 = vector.multi_reduction <add>, %155, %cst_78 [1] : vector<8x32xf32> to vector<8xf32>
    %157 = vector.shape_cast %156 : vector<8xf32> to vector<8x1xf32>
    %cst_79 = arith.constant 0.0322580636 : f32
    %158 = vector.broadcast %cst_79 : f32 to vector<8x1xf32>
    %159 = arith.mulf %157, %158 : vector<8x1xf32>
    %160 = math.sqrt %159 : vector<8x1xf32>
    %161 = vector.broadcast %152 : vector<8x1xf32> to vector<8x32xf32>
    %162 = arith.subf %146, %161 : vector<8x32xf32>
    %cst_80 = arith.constant 9.99999997E-7 : f32
    %163 = vector.broadcast %cst_80 : f32 to vector<8x1xf32>
    %164 = arith.addf %160, %163 : vector<8x1xf32>
    %165 = vector.broadcast %164 : vector<8x1xf32> to vector<8x32xf32>
    %166 = arith.divf %162, %165 : vector<8x32xf32>
    %167 = vector.broadcast %147 : vector<1x32xf32> to vector<8x32xf32>
    %168 = arith.mulf %167, %166 : vector<8x32xf32>
    %169 = vector.broadcast %148 : vector<1x32xf32> to vector<8x32xf32>
    %170 = arith.addf %168, %169 : vector<8x32xf32>
    %171 = arith.truncf %170 : vector<8x32xf32> to vector<8x32xbf16>
    %c0_81 = arith.constant 0 : index
    %c0_82 = arith.constant 0 : index
    %172 = vector.load %arg17[%c0_81, %c0_82] : memref<32x64xbf16, #tpu.memory_space<vmem>>, vector<32x64xbf16>
    %cst_83 = arith.constant dense<0.000000e+00> : vector<8x64xf32>
    %173 = tpu.matmul %171, %172, %cst_83 {dimension_numbers = #tpu.dot_dimension_numbers<[1], [0], [0], [1], [0, 0, 1, 1], [], []>} : vector<8x32xbf16>, vector<32x64xbf16>, vector<8x64xf32> -> vector<8x64xf32>
    %c0_84 = arith.constant 0 : index
    %c0_85 = arith.constant 0 : index
    %174 = vector.load %arg18[%c0_84, %c0_85] : memref<1x64xf32, #tpu.memory_space<vmem>>, vector<1x64xf32>
    %175 = vector.broadcast %174 : vector<1x64xf32> to vector<8x64xf32>
    %176 = arith.addf %173, %175 : vector<8x64xf32>
    %cst_86 = arith.constant 0.000000e+00 : f32
    %177 = vector.broadcast %cst_86 : f32 to vector<8x64xf32>
    %178 = arith.maximumf %176, %177 : vector<8x64xf32>
    %179 = arith.truncf %178 : vector<8x64xf32> to vector<8x64xbf16>
    %c0_87 = arith.constant 0 : index
    %c0_88 = arith.constant 0 : index
    %180 = vector.load %arg19[%c0_87, %c0_88] : memref<64x32xbf16, #tpu.memory_space<vmem>>, vector<64x32xbf16>
    %cst_89 = arith.constant dense<0.000000e+00> : vector<8x32xf32>
    %181 = tpu.matmul %179, %180, %cst_89 {dimension_numbers = #tpu.dot_dimension_numbers<[1], [0], [0], [1], [0, 0, 1, 1], [], []>} : vector<8x64xbf16>, vector<64x32xbf16>, vector<8x32xf32> -> vector<8x32xf32>
    %c0_90 = arith.constant 0 : index
    %c0_91 = arith.constant 0 : index
    %182 = vector.load %arg20[%c0_90, %c0_91] : memref<1x32xf32, #tpu.memory_space<vmem>>, vector<1x32xf32>
    %183 = vector.broadcast %182 : vector<1x32xf32> to vector<8x32xf32>
    %184 = arith.addf %181, %183 : vector<8x32xf32>
    %185 = arith.addf %184, %146 : vector<8x32xf32>
    %c0_92 = arith.constant 0 : index
    %c0_93 = arith.constant 0 : index
    %c0_94 = arith.constant 0 : index
    %186 = vector.load %arg21[%c0_92, %c0_93, %c0_94] : memref<1x8x32xf32, #tpu.memory_space<vmem>>, vector<1x8x32xf32>
    %187 = vector.shape_cast %186 : vector<1x8x32xf32> to vector<8x32xf32>
    %188 = vector.shape_cast %185 : vector<8x32xf32> to vector<1x8x32xf32>
    tpu.vector_store %arg21[%c0_92, %c0_93, %c0_94], %188 {strides = array<i32>} : memref<1x8x32xf32, #tpu.memory_space<vmem>>, vector<1x8x32xf32>,
    return
  }
  func.func @transform_0(%arg0: i32, %arg1: i32) -> (i32, i32, i32) {
    %c0_i32 = arith.constant 0 : i32
    %c0_i32_0 = arith.constant 0 : i32
    return %arg0, %arg1, %c0_i32 : i32, i32, i32
  }
  func.func @transform_1(%arg0: i32, %arg1: i32) -> (i32, i32, i32) {
    %c0_i32 = arith.constant 0 : i32
    %c0_i32_0 = arith.constant 0 : i32
    %c0_i32_1 = arith.constant 0 : i32
    return %arg0, %c0_i32, %c0_i32_0 : i32, i32, i32
  }
  func.func @transform_2(%arg0: i32, %arg1: i32) -> (i32, i32, i32) {
    %c0_i32 = arith.constant 0 : i32
    %c0_i32_0 = arith.constant 0 : i32
    %c0_i32_1 = arith.constant 0 : i32
    return %arg0, %c0_i32, %c0_i32_0 : i32, i32, i32
  }
  func.func @transform_3(%arg0: i32, %arg1: i32) -> (i32, i32) {
    %c0_i32 = arith.constant 0 : i32
    %c0_i32_0 = arith.constant 0 : i32
    %c0_i32_1 = arith.constant 0 : i32
    return %c0_i32, %c0_i32_0 : i32, i32
  }
  func.func @transform_4(%arg0: i32, %arg1: i32) -> (i32, i32) {
    %c0_i32 = arith.constant 0 : i32
    %c0_i32_0 = arith.constant 0 : i32
    %c0_i32_1 = arith.constant 0 : i32
    return %c0_i32, %c0_i32_0 : i32, i32
  }
  func.func @transform_5(%arg0: i32, %arg1: i32) -> (i32, i32) {
    %c0_i32 = arith.constant 0 : i32
    %c0_i32_0 = arith.constant 0 : i32
    %c0_i32_1 = arith.constant 0 : i32
    return %c0_i32, %c0_i32_0 : i32, i32
  }
  func.func @transform_6(%arg0: i32, %arg1: i32) -> (i32, i32) {
    %c0_i32 = arith.constant 0 : i32
    %c0_i32_0 = arith.constant 0 : i32
    %c0_i32_1 = arith.constant 0 : i32
    return %c0_i32, %c0_i32_0 : i32, i32
  }
  func.func @transform_7(%arg0: i32, %arg1: i32) -> (i32, i32) {
    %c0_i32 = arith.constant 0 : i32
    %c0_i32_0 = arith.constant 0 : i32
    %c0_i32_1 = arith.constant 0 : i32
    return %c0_i32, %c0_i32_0 : i32, i32
  }
  func.func @transform_8(%arg0: i32, %arg1: i32) -> (i32, i32) {
    %c0_i32 = arith.constant 0 : i32
    %c0_i32_0 = arith.constant 0 : i32
    %c0_i32_1 = arith.constant 0 : i32
    return %c0_i32, %c0_i32_0 : i32, i32
  }
  func.func @transform_9(%arg0: i32, %arg1: i32) -> (i32, i32) {
    %c0_i32 = arith.constant 0 : i32
    %c0_i32_0 = arith.constant 0 : i32
    %c0_i32_1 = arith.constant 0 : i32
    return %c0_i32, %c0_i32_0 : i32, i32
  }
  func.func @transform_10(%arg0: i32, %arg1: i32) -> (i32, i32) {
    %c0_i32 = arith.constant 0 : i32
    %c0_i32_0 = arith.constant 0 : i32
    %c0_i32_1 = arith.constant 0 : i32
    return %c0_i32, %c0_i32_0 : i32, i32
  }
  func.func @transform_11(%arg0: i32, %arg1: i32) -> (i32, i32) {
    %c0_i32 = arith.constant 0 : i32
    %c0_i32_0 = arith.constant 0 : i32
    %c0_i32_1 = arith.constant 0 : i32
    return %c0_i32, %c0_i32_0 : i32, i32
  }
  func.func @transform_12(%arg0: i32, %arg1: i32) -> (i32, i32) {
    %c0_i32 = arith.constant 0 : i32
    %c0_i32_0 = arith.constant 0 : i32
    %c0_i32_1 = arith.constant 0 : i32
    return %c0_i32, %c0_i32_0 : i32, i32
  }
  func.func @transform_13(%arg0: i32, %arg1: i32) -> (i32, i32) {
    %c0_i32 = arith.constant 0 : i32
    %c0_i32_0 = arith.constant 0 : i32
    %c0_i32_1 = arith.constant 0 : i32
    return %c0_i32, %c0_i32_0 : i32, i32
  }
  func.func @transform_14(%arg0: i32, %arg1: i32) -> (i32, i32) {
    %c0_i32 = arith.constant 0 : i32
    %c0_i32_0 = arith.constant 0 : i32
    %c0_i32_1 = arith.constant 0 : i32
    return %c0_i32, %c0_i32_0 : i32, i32
  }
  func.func @transform_15(%arg0: i32, %arg1: i32) -> (i32, i32) {
    %c0_i32 = arith.constant 0 : i32
    %c0_i32_0 = arith.constant 0 : i32
    %c0_i32_1 = arith.constant 0 : i32
    return %c0_i32, %c0_i32_0 : i32, i32
  }
  func.func @transform_16(%arg0: i32, %arg1: i32) -> (i32, i32) {
    %c0_i32 = arith.constant 0 : i32
    %c0_i32_0 = arith.constant 0 : i32
    %c0_i32_1 = arith.constant 0 : i32
    return %c0_i32, %c0_i32_0 : i32, i32
  }
  func.func @transform_17(%arg0: i32, %arg1: i32) -> (i32, i32) {
    %c0_i32 = arith.constant 0 : i32
    %c0_i32_0 = arith.constant 0 : i32
    %c0_i32_1 = arith.constant 0 : i32
    return %c0_i32, %c0_i32_0 : i32, i32
  }
  func.func @transform_18(%arg0: i32, %arg1: i32) -> (i32, i32) {
    %c0_i32 = arith.constant 0 : i32
    %c0_i32_0 = arith.constant 0 : i32
    %c0_i32_1 = arith.constant 0 : i32
    return %c0_i32, %c0_i32_0 : i32, i32
  }
  func.func @transform_19(%arg0: i32, %arg1: i32) -> (i32, i32, i32) {
    %c0_i32 = arith.constant 0 : i32
    %c0_i32_0 = arith.constant 0 : i32
    return %arg0, %arg1, %c0_i32 : i32, i32, i32
  }
  func.func @transform_20(%arg0: i32, %arg1: i32) -> (i32, i32, i32, i32) {
    %c0_i32 = arith.constant 0 : i32
    %c0_i32_0 = arith.constant 0 : i32
    %c0_i32_1 = arith.constant 0 : i32
    return %arg0, %c0_i32, %arg1, %c0_i32_0 : i32, i32, i32, i32
  }
}

</mosaic_0001>

<llo_original>
// kernel: tpu_custom_call.1
$region0: #{tpu_custom_call.1}
  #allocation0 [shape = 'u32[]', space=smem, size = 0x4, offset = 0x4, fixed_abs, tag = 'smem constant byte address 0x4 - core index']
  #allocation1 [shape = 'u32[144,128]{1,0:T(1,128)}', space=vmem, size = 0x12000, scoped, tag = 'internal scratch']
  #allocation2 [shape = 'f32[8,32]{1,0:T(8,128)}', space=vmem, size = 0x1000, scoped, tag = 'scratch operand']
  %s0 = inlined_call_operand.vmem [shape: f32[2,8,32], index: 0, kind: input, shape index: {}]
  %s1 = inlined_call_operand.vmem [shape: f32[2,8,32], index: 1, kind: input, shape index: {}]
  %s2 = inlined_call_operand.hbm [shape: f32[2,1,8], index: 2, kind: input, shape index: {}]
  %s3 = inlined_call_operand.vmem [shape: bf16[32,32], index: 3, kind: input, shape index: {}]
  %s4 = inlined_call_operand.hbm [shape: f32[1,32], index: 4, kind: input, shape index: {}]
  %s5 = inlined_call_operand.hbm [shape: bf16[32,32], index: 5, kind: input, shape index: {}]
  %s6 = inlined_call_operand.hbm [shape: f32[1,32], index: 6, kind: input, shape index: {}]
  %s7 = inlined_call_operand.hbm [shape: bf16[32,32], index: 7, kind: input, shape index: {}]
  %s8 = inlined_call_operand.hbm [shape: f32[1,32], index: 8, kind: input, shape index: {}]
  %s9 = inlined_call_operand.vmem [shape: bf16[32,32], index: 9, kind: input, shape index: {}]
  %s10 = inlined_call_operand.vmem [shape: f32[1,32], index: 10, kind: input, shape index: {}]
  %s11 = inlined_call_operand.vmem [shape: f32[1,32], index: 11, kind: input, shape index: {}]
  %s12 = inlined_call_operand.vmem [shape: f32[1,32], index: 12, kind: input, shape index: {}]
  %s13 = inlined_call_operand.vmem [shape: f32[1,32], index: 13, kind: input, shape index: {}]
  %s14 = inlined_call_operand.vmem [shape: f32[1,32], index: 14, kind: input, shape index: {}]
  %s15 = inlined_call_operand.hbm [shape: bf16[32,64], index: 15, kind: input, shape index: {}]
  %s16 = inlined_call_operand.vmem [shape: f32[1,64], index: 16, kind: input, shape index: {}]
  %s17 = inlined_call_operand.vmem [shape: bf16[64,32], index: 17, kind: input, shape index: {}]
  %s18 = inlined_call_operand.vmem [shape: f32[1,32], index: 18, kind: input, shape index: {}]
  %s19 = inlined_call_operand.hbm [shape: f32[2,8,32], index: 19, kind: output, shape index: {0}]
  %s20 = inlined_call_operand.hbm [shape: f32[2,4,8,8], index: 20, kind: output, shape index: {1}]
  %21 = xla_tuple %s19, %s20
  %s22 = sld [smem:[#allocation0]]
  $region145: #{tpu_custom_call.1} parent=0
    _
  %s24 = ssub.s32 1, %s22
  %s25 = scalar_select 0, %s24, %s22
  $region1: #{tpu_custom_call.1} parent=0
    #allocation3 [shape = 'u8[1024]{0}', space=vmem, size = 0x400, scoped, tag = 'input window, operand 2']
    #allocation4 [shape = 's32[2]{0}', space=sflag, size = 0x8, scoped, tag = 'scoped memory for tpu_custom_call.1']
    #allocation5 [shape = 's32[2]{0}', space=sflag, size = 0x8, scoped, tag = 'scoped memory for tpu_custom_call.1']
    #allocation6 [shape = 'u8[512]{0}', space=vmem, size = 0x400, scoped, tag = 'input window, operand 4, single buffered']
    #allocation7 [shape = 's32[1]{0}', space=sflag, size = 0x4, scoped, tag = 'scoped memory for tpu_custom_call.1']
    #allocation8 [shape = 'u8[8192]{0}', space=vmem, size = 0x2000, scoped, tag = 'input window, operand 5, single buffered']
    #allocation9 [shape = 'u8[512]{0}', space=vmem, size = 0x400, scoped, tag = 'input window, operand 6, single buffered']
    #allocation10 [shape = 's32[1]{0}', space=sflag, size = 0x4, scoped, tag = 'scoped memory for tpu_custom_call.1']
    #allocation11 [shape = 'u8[8192]{0}', space=vmem, size = 0x2000, scoped, tag = 'input window, operand 7, single buffered']
    #allocation12 [shape = 'u8[512]{0}', space=vmem, size = 0x400, scoped, tag = 'input window, operand 8, single buffered']
    #allocation13 [shape = 's32[1]{0}', space=sflag, size = 0x4, scoped, tag = 'scoped memory for tpu_custom_call.1']
    #allocation14 [shape = 'u8[8192]{0}', space=vmem, size = 0x2000, scoped, tag = 'input window, operand 15, single buffered']
    #allocation15 [shape = 'u8[8192]{0}', space=vmem, size = 0x2000, scoped, tag = 'output window, operand 0']
    #allocation16 [shape = 'u8[32768]{0}', space=vmem, size = 0x8000, scoped, tag = 'output window, operand 1']
    #allocation17 [shape = 's32[2]{0}', space=sflag, size = 0x8, scoped, tag = 'scoped memory for tpu_custom_call.1']
    %26 = vsyncpa [#allocation4], 0
    %s27 = scalar_lea.sflag [#allocation4], 1
    %28 = vsyncpa %s27, 0
    %29 = vsyncpa [#allocation7], 0
    %30 = vsyncpa [#allocation10], 0
    %31 = vsyncpa [#allocation13], 0
    %32 = vsyncpa [#allocation5], 0
    %s33 = scalar_lea.sflag [#allocation5], 1
    %34 = vsyncpa %s33, 0
    %35 = vsyncpa [#allocation17], 0
    %s36 = scalar_lea.sflag [#allocation17], 1
    %37 = vsyncpa %s36, 0
    loop: start=0, step=1, limit=4
    $region2: #{tpu_custom_call.1} parent=1 // loop_pre_header
      _
    $region3: #{tpu_custom_call.1} parent=1 // loop_header
      %s39 = sphi 0, %s43
      %p40 = scmp.ge.s32.totalorder %s39, 4
      %s46 = sphi 0, %s58
      %s47 = sphi 0, %s54
      %s48 = sphi 0, %s46
      %s49 = sphi 0, %s47
      %s50 = sphi 0, %s48
      %s51 = sphi 0, %s49
      %s63 = sphi 0, %s65
      %s66 = sphi 0, %s63
      %s67 = sphi 0, %s66
      %s83 = sphi 0, %s67
      %s89 = sphi 0, %s91
      %s92 = sphi 0, %s89
      %s93 = sphi 0, %s92
      %s109 = sphi 0, %s93
      %s115 = sphi 0, %s117
      %s118 = sphi 0, %s115
      %s119 = sphi 0, %s118
      %s135 = sphi 0, %s119
      %s139 = sphi 0, %s139
      %s141 = sphi 0, %s139
      %s142 = sphi 0, %s141
      %s156 = sphi 0, %s142
      %s160 = sphi 0, %s160
      %s162 = sphi 0, %s160
      %s163 = sphi 0, %s162
      %s177 = sphi 0, %s163
      %s181 = sphi 0, %s181
      %s183 = sphi 0, %s181
      %s184 = sphi 0, %s183
      %s198 = sphi 0, %s184
      %s202 = sphi 0, %s202
      %s204 = sphi 0, %s202
      %s205 = sphi 0, %s204
      %s219 = sphi 0, %s205
      %s223 = sphi 0, %s223
      %s225 = sphi 0, %s223
      %s226 = sphi 0, %s225
      %s240 = sphi 0, %s226
      %s244 = sphi 0, %s244
      %s246 = sphi 0, %s244
      %s247 = sphi 0, %s246
      %s261 = sphi 0, %s247
      %s265 = sphi 0, %s265
      %s267 = sphi 0, %s265
      %s268 = sphi 0, %s267
      %s282 = sphi 0, %s268
      %s286 = sphi 0, %s286
      %s288 = sphi 0, %s286
      %s289 = sphi 0, %s288
      %s303 = sphi 0, %s289
      %s307 = sphi 0, %s307
      %s309 = sphi 0, %s307
      %s310 = sphi 0, %s309
      %s324 = sphi 0, %s310
      %s328 = sphi 0, %s328
      %s330 = sphi 0, %s328
      %s331 = sphi 0, %s330
      %s345 = sphi 0, %s331
      %s349 = sphi 0, %s349
      %s351 = sphi 0, %s349
      %s352 = sphi 0, %s351
      %s366 = sphi 0, %s352
      %s370 = sphi 0, %s370
      %s372 = sphi 0, %s370
      %s373 = sphi 0, %s372
      %s387 = sphi 0, %s373
      %s391 = sphi 0, %s391
      %s393 = sphi 0, %s391
      %s394 = sphi 0, %s393
      %s408 = sphi 0, %s394
      %s412 = sphi 0, %s412
      %s414 = sphi 0, %s412
      %s415 = sphi 0, %s414
      %s429 = sphi 0, %s415
      %s433 = sphi 0, %s433
      %s435 = sphi 0, %s433
      %s436 = sphi 0, %s435
      %s450 = sphi 0, %s436
      %s454 = sphi 0, %s454
      %s456 = sphi 0, %s454
      %s457 = sphi 0, %s456
      %s471 = sphi 0, %s457
      %s479 = sphi 0, %s481
      %s482 = sphi 0, %s479
      %s483 = sphi 0, %s482
      %s499 = sphi 0, %s483
      %s507 = sphi 0, %s509
      %s510 = sphi 0, %s507
      %s511 = sphi 0, %s510
      %s527 = sphi 0, %s511
    $region4: #{tpu_custom_call.1} parent=1 // loop_header_branch
      %42 = sbr.rel (%p40) target = $region8
    $region5: #{tpu_custom_call.1} parent=1 // loop_body
      %s44 = ssub.s32 %s39, 1
      %s45 = ssub.s32 %s39, 2
      %s52 = sadd.s32 1, %s47
      %p53 = scmp.ge.s32.totalorder %s52, 1
      %s54 = scalar_select %p53, 0, %s52
      %s55 = sadd.s32 1, %s46
      %s56 = scalar_select %p53, %s55, %s46
      %p57 = scmp.ge.s32.totalorder %s56, 2
      %s58 = scalar_select %p57, 0, %s56
      %s59 = ssub.s32 %s46, %s58
      %s60 = ssub.s32 %s47, %s54
      %s61 = sor.u32 %s59, %s60
      %p62 = scmp.eq.s32.totalorder %s61, 0
      %s64 = sadd.s32 %s63, 1
      %s65 = scalar_select %p62, %s63, %s64
      %p68 = pneg %p62
      %p69 = scmp.eq.s32.totalorder %s39, 1
      %p70 = por %p68, %p69
      %p71 = scmp.ne.s32.totalorder %s63, %s66
      %p72 = scmp.eq.s32.totalorder %s39, 0
      %p73 = por %p71, %p72
      %p74 = scmp.ne.s32.totalorder %s63, %s66
      %p75 = scmp.eq.s32.totalorder %s44, 1
      %p76 = por %p74, %p75
      %p77 = scmp.ne.s32.totalorder %s66, %s67
      %p78 = scmp.eq.s32.totalorder %s44, 0
      %p79 = por %p77, %p78
      %p80 = scmp.ne.s32.totalorder %s66, %s67
      %p81 = scmp.eq.s32.totalorder %s45, 1
      %p82 = por %p80, %p81
      %p84 = scmp.ne.s32.totalorder %s67, %s83
      %p85 = scmp.eq.s32.totalorder %s45, 0
      %p86 = por %p84, %p85
      %s87 = ssub.s32 %s46, %s58
      %p88 = scmp.eq.s32.totalorder %s87, 0
      %s90 = sadd.s32 %s89, 1
      %s91 = scalar_select %p88, %s89, %s90
      %p94 = pneg %p88
      %p95 = scmp.eq.s32.totalorder %s39, 1
      %p96 = por %p94, %p95
      %p97 = scmp.ne.s32.totalorder %s89, %s92
      %p98 = scmp.eq.s32.totalorder %s39, 0
      %p99 = por %p97, %p98
      %p100 = scmp.ne.s32.totalorder %s89, %s92
      %p101 = scmp.eq.s32.totalorder %s44, 1
      %p102 = por %p100, %p101
      %p103 = scmp.ne.s32.totalorder %s92, %s93
      %p104 = scmp.eq.s32.totalorder %s44, 0
      %p105 = por %p103, %p104
      %p106 = scmp.ne.s32.totalorder %s92, %s93
      %p107 = scmp.eq.s32.totalorder %s45, 1
      %p108 = por %p106, %p107
      %p110 = scmp.ne.s32.totalorder %s93, %s109
      %p111 = scmp.eq.s32.totalorder %s45, 0
      %p112 = por %p110, %p111
      %s113 = ssub.s32 %s46, %s58
      %p114 = scmp.eq.s32.totalorder %s113, 0
      %s116 = sadd.s32 %s115, 1
      %s117 = scalar_select %p114, %s115, %s116
      %p120 = pneg %p114
      %p121 = scmp.eq.s32.totalorder %s39, 1
      %p122 = por %p120, %p121
      %p123 = scmp.ne.s32.totalorder %s115, %s118
      %p124 = scmp.eq.s32.totalorder %s39, 0
      %p125 = por %p123, %p124
      %p126 = scmp.ne.s32.totalorder %s115, %s118
      %p127 = scmp.eq.s32.totalorder %s44, 1
      %p128 = por %p126, %p127
      %p129 = scmp.ne.s32.totalorder %s118, %s119
      %p130 = scmp.eq.s32.totalorder %s44, 0
      %p131 = por %p129, %p130
      %p132 = scmp.ne.s32.totalorder %s118, %s119
      %p133 = scmp.eq.s32.totalorder %s45, 1
      %p134 = por %p132, %p133
      %p136 = scmp.ne.s32.totalorder %s119, %s135
      %p137 = scmp.eq.s32.totalorder %s45, 0
      %p138 = por %p136, %p137
      %s140 = sadd.s32 %s139, 1
      %p143 = scmp.eq.s32.totalorder %s39, 1
      %p144 = scmp.ne.s32.totalorder %s139, %s141
      %p145 = scmp.eq.s32.totalorder %s39, 0
      %p146 = por %p144, %p145
      %p147 = scmp.ne.s32.totalorder %s139, %s141
      %p148 = scmp.eq.s32.totalorder %s44, 1
      %p149 = por %p147, %p148
      %p150 = scmp.ne.s32.totalorder %s141, %s142
      %p151 = scmp.eq.s32.totalorder %s44, 0
      %p152 = por %p150, %p151
      %p153 = scmp.ne.s32.totalorder %s141, %s142
      %p154 = scmp.eq.s32.totalorder %s45, 1
      %p155 = por %p153, %p154
      %p157 = scmp.ne.s32.totalorder %s142, %s156
      %p158 = scmp.eq.s32.totalorder %s45, 0
      %p159 = por %p157, %p158
      %s161 = sadd.s32 %s160, 1
      %p164 = scmp.eq.s32.totalorder %s39, 1
      %p165 = scmp.ne.s32.totalorder %s160, %s162
      %p166 = scmp.eq.s32.totalorder %s39, 0
      %p167 = por %p165, %p166
      %p168 = scmp.ne.s32.totalorder %s160, %s162
      %p169 = scmp.eq.s32.totalorder %s44, 1
      %p170 = por %p168, %p169
      %p171 = scmp.ne.s32.totalorder %s162, %s163
      %p172 = scmp.eq.s32.totalorder %s44, 0
      %p173 = por %p171, %p172
      %p174 = scmp.ne.s32.totalorder %s162, %s163
      %p175 = scmp.eq.s32.totalorder %s45, 1
      %p176 = por %p174, %p175
      %p178 = scmp.ne.s32.totalorder %s163, %s177
      %p179 = scmp.eq.s32.totalorder %s45, 0
      %p180 = por %p178, %p179
      %s182 = sadd.s32 %s181, 1
      %p185 = scmp.eq.s32.totalorder %s39, 1
      %p186 = scmp.ne.s32.totalorder %s181, %s183
      %p187 = scmp.eq.s32.totalorder %s39, 0
      %p188 = por %p186, %p187
      %p189 = scmp.ne.s32.totalorder %s181, %s183
      %p190 = scmp.eq.s32.totalorder %s44, 1
      %p191 = por %p189, %p190
      %p192 = scmp.ne.s32.totalorder %s183, %s184
      %p193 = scmp.eq.s32.totalorder %s44, 0
      %p194 = por %p192, %p193
      %p195 = scmp.ne.s32.totalorder %s183, %s184
      %p196 = scmp.eq.s32.totalorder %s45, 1
      %p197 = por %p195, %p196
      %p199 = scmp.ne.s32.totalorder %s184, %s198
      %p200 = scmp.eq.s32.totalorder %s45, 0
      %p201 = por %p199, %p200
      %s203 = sadd.s32 %s202, 1
      %p206 = scmp.eq.s32.totalorder %s39, 1
      %p207 = scmp.ne.s32.totalorder %s202, %s204
      %p208 = scmp.eq.s32.totalorder %s39, 0
      %p209 = por %p207, %p208
      %p210 = scmp.ne.s32.totalorder %s202, %s204
      %p211 = scmp.eq.s32.totalorder %s44, 1
      %p212 = por %p210, %p211
      %p213 = scmp.ne.s32.totalorder %s204, %s205
      %p214 = scmp.eq.s32.totalorder %s44, 0
      %p215 = por %p213, %p214
      %p216 = scmp.ne.s32.totalorder %s204, %s205
      %p217 = scmp.eq.s32.totalorder %s45, 1
      %p218 = por %p216, %p217
      %p220 = scmp.ne.s32.totalorder %s205, %s219
      %p221 = scmp.eq.s32.totalorder %s45, 0
      %p222 = por %p220, %p221
      %s224 = sadd.s32 %s223, 1
      %p227 = scmp.eq.s32.totalorder %s39, 1
      %p228 = scmp.ne.s32.totalorder %s223, %s225
      %p229 = scmp.eq.s32.totalorder %s39, 0
      %p230 = por %p228, %p229
      %p231 = scmp.ne.s32.totalorder %s223, %s225
      %p232 = scmp.eq.s32.totalorder %s44, 1
      %p233 = por %p231, %p232
      %p234 = scmp.ne.s32.totalorder %s225, %s226
      %p235 = scmp.eq.s32.totalorder %s44, 0
      %p236 = por %p234, %p235
      %p237 = scmp.ne.s32.totalorder %s225, %s226
      %p238 = scmp.eq.s32.totalorder %s45, 1
      %p239 = por %p237, %p238
      %p241 = scmp.ne.s32.totalorder %s226, %s240
      %p242 = scmp.eq.s32.totalorder %s45, 0
      %p243 = por %p241, %p242
      %s245 = sadd.s32 %s244, 1
      %p248 = scmp.eq.s32.totalorder %s39, 1
      %p249 = scmp.ne.s32.totalorder %s244, %s246
      %p250 = scmp.eq.s32.totalorder %s39, 0
      %p251 = por %p249, %p250
      %p252 = scmp.ne.s32.totalorder %s244, %s246
      %p253 = scmp.eq.s32.totalorder %s44, 1
      %p254 = por %p252, %p253
      %p255 = scmp.ne.s32.totalorder %s246, %s247
      %p256 = scmp.eq.s32.totalorder %s44, 0
      %p257 = por %p255, %p256
      %p258 = scmp.ne.s32.totalorder %s246, %s247
      %p259 = scmp.eq.s32.totalorder %s45, 1
      %p260 = por %p258, %p259
      %p262 = scmp.ne.s32.totalorder %s247, %s261
      %p263 = scmp.eq.s32.totalorder %s45, 0
      %p264 = por %p262, %p263
      %s266 = sadd.s32 %s265, 1
      %p269 = scmp.eq.s32.totalorder %s39, 1
      %p270 = scmp.ne.s32.totalorder %s265, %s267
      %p271 = scmp.eq.s32.totalorder %s39, 0
      %p272 = por %p270, %p271
      %p273 = scmp.ne.s32.totalorder %s265, %s267
      %p274 = scmp.eq.s32.totalorder %s44, 1
      %p275 = por %p273, %p274
      %p276 = scmp.ne.s32.totalorder %s267, %s268
      %p277 = scmp.eq.s32.totalorder %s44, 0
      %p278 = por %p276, %p277
      %p279 = scmp.ne.s32.totalorder %s267, %s268
      %p280 = scmp.eq.s32.totalorder %s45, 1
      %p281 = por %p279, %p280
      %p283 = scmp.ne.s32.totalorder %s268, %s282
      %p284 = scmp.eq.s32.totalorder %s45, 0
      %p285 = por %p283, %p284
      %s287 = sadd.s32 %s286, 1
      %p290 = scmp.eq.s32.totalorder %s39, 1
      %p291 = scmp.ne.s32.totalorder %s286, %s288
      %p292 = scmp.eq.s32.totalorder %s39, 0
      %p293 = por %p291, %p292
      %p294 = scmp.ne.s32.totalorder %s286, %s288
      %p295 = scmp.eq.s32.totalorder %s44, 1
      %p296 = por %p294, %p295
      %p297 = scmp.ne.s32.totalorder %s288, %s289
      %p298 = scmp.eq.s32.totalorder %s44, 0
      %p299 = por %p297, %p298
      %p300 = scmp.ne.s32.totalorder %s288, %s289
      %p301 = scmp.eq.s32.totalorder %s45, 1
      %p302 = por %p300, %p301
      %p304 = scmp.ne.s32.totalorder %s289, %s303
      %p305 = scmp.eq.s32.totalorder %s45, 0
      %p306 = por %p304, %p305
      %s308 = sadd.s32 %s307, 1
      %p311 = scmp.eq.s32.totalorder %s39, 1
      %p312 = scmp.ne.s32.totalorder %s307, %s309
      %p313 = scmp.eq.s32.totalorder %s39, 0
      %p314 = por %p312, %p313
      %p315 = scmp.ne.s32.totalorder %s307, %s309
      %p316 = scmp.eq.s32.totalorder %s44, 1
      %p317 = por %p315, %p316
      %p318 = scmp.ne.s32.totalorder %s309, %s310
      %p319 = scmp.eq.s32.totalorder %s44, 0
      %p320 = por %p318, %p319
      %p321 = scmp.ne.s32.totalorder %s309, %s310
      %p322 = scmp.eq.s32.totalorder %s45, 1
      %p323 = por %p321, %p322
      %p325 = scmp.ne.s32.totalorder %s310, %s324
      %p326 = scmp.eq.s32.totalorder %s45, 0
      %p327 = por %p325, %p326
      %s329 = sadd.s32 %s328, 1
      %p332 = scmp.eq.s32.totalorder %s39, 1
      %p333 = scmp.ne.s32.totalorder %s328, %s330
      %p334 = scmp.eq.s32.totalorder %s39, 0
      %p335 = por %p333, %p334
      %p336 = scmp.ne.s32.totalorder %s328, %s330
      %p337 = scmp.eq.s32.totalorder %s44, 1
      %p338 = por %p336, %p337
      %p339 = scmp.ne.s32.totalorder %s330, %s331
      %p340 = scmp.eq.s32.totalorder %s44, 0
      %p341 = por %p339, %p340
      %p342 = scmp.ne.s32.totalorder %s330, %s331
      %p343 = scmp.eq.s32.totalorder %s45, 1
      %p344 = por %p342, %p343
      %p346 = scmp.ne.s32.totalorder %s331, %s345
      %p347 = scmp.eq.s32.totalorder %s45, 0
      %p348 = por %p346, %p347
      %s350 = sadd.s32 %s349, 1
      %p353 = scmp.eq.s32.totalorder %s39, 1
      %p354 = scmp.ne.s32.totalorder %s349, %s351
      %p355 = scmp.eq.s32.totalorder %s39, 0
      %p356 = por %p354, %p355
      %p357 = scmp.ne.s32.totalorder %s349, %s351
      %p358 = scmp.eq.s32.totalorder %s44, 1
      %p359 = por %p357, %p358
      %p360 = scmp.ne.s32.totalorder %s351, %s352
      %p361 = scmp.eq.s32.totalorder %s44, 0
      %p362 = por %p360, %p361
      %p363 = scmp.ne.s32.totalorder %s351, %s352
      %p364 = scmp.eq.s32.totalorder %s45, 1
      %p365 = por %p363, %p364
      %p367 = scmp.ne.s32.totalorder %s352, %s366
      %p368 = scmp.eq.s32.totalorder %s45, 0
      %p369 = por %p367, %p368
      %s371 = sadd.s32 %s370, 1
      %p374 = scmp.eq.s32.totalorder %s39, 1
      %p375 = scmp.ne.s32.totalorder %s370, %s372
      %p376 = scmp.eq.s32.totalorder %s39, 0
      %p377 = por %p375, %p376
      %p378 = scmp.ne.s32.totalorder %s370, %s372
      %p379 = scmp.eq.s32.totalorder %s44, 1
      %p380 = por %p378, %p379
      %p381 = scmp.ne.s32.totalorder %s372, %s373
      %p382 = scmp.eq.s32.totalorder %s44, 0
      %p383 = por %p381, %p382
      %p384 = scmp.ne.s32.totalorder %s372, %s373
      %p385 = scmp.eq.s32.totalorder %s45, 1
      %p386 = por %p384, %p385
      %p388 = scmp.ne.s32.totalorder %s373, %s387
      %p389 = scmp.eq.s32.totalorder %s45, 0
      %p390 = por %p388, %p389
      %s392 = sadd.s32 %s391, 1
      %p395 = scmp.eq.s32.totalorder %s39, 1
      %p396 = scmp.ne.s32.totalorder %s391, %s393
      %p397 = scmp.eq.s32.totalorder %s39, 0
      %p398 = por %p396, %p397
      %p399 = scmp.ne.s32.totalorder %s391, %s393
      %p400 = scmp.eq.s32.totalorder %s44, 1
      %p401 = por %p399, %p400
      %p402 = scmp.ne.s32.totalorder %s393, %s394
      %p403 = scmp.eq.s32.totalorder %s44, 0
      %p404 = por %p402, %p403
      %p405 = scmp.ne.s32.totalorder %s393, %s394
      %p406 = scmp.eq.s32.totalorder %s45, 1
      %p407 = por %p405, %p406
      %p409 = scmp.ne.s32.totalorder %s394, %s408
      %p410 = scmp.eq.s32.totalorder %s45, 0
      %p411 = por %p409, %p410
      %s413 = sadd.s32 %s412, 1
      %p416 = scmp.eq.s32.totalorder %s39, 1
      %p417 = scmp.ne.s32.totalorder %s412, %s414
      %p418 = scmp.eq.s32.totalorder %s39, 0
      %p419 = por %p417, %p418
      %p420 = scmp.ne.s32.totalorder %s412, %s414
      %p421 = scmp.eq.s32.totalorder %s44, 1
      %p422 = por %p420, %p421
      %p423 = scmp.ne.s32.totalorder %s414, %s415
      %p424 = scmp.eq.s32.totalorder %s44, 0
      %p425 = por %p423, %p424
      %p426 = scmp.ne.s32.totalorder %s414, %s415
      %p427 = scmp.eq.s32.totalorder %s45, 1
      %p428 = por %p426, %p427
      %p430 = scmp.ne.s32.totalorder %s415, %s429
      %p431 = scmp.eq.s32.totalorder %s45, 0
      %p432 = por %p430, %p431
      %s434 = sadd.s32 %s433, 1
      %p437 = scmp.eq.s32.totalorder %s39, 1
      %p438 = scmp.ne.s32.totalorder %s433, %s435
      %p439 = scmp.eq.s32.totalorder %s39, 0
      %p440 = por %p438, %p439
      %p441 = scmp.ne.s32.totalorder %s433, %s435
      %p442 = scmp.eq.s32.totalorder %s44, 1
      %p443 = por %p441, %p442
      %p444 = scmp.ne.s32.totalorder %s435, %s436
      %p445 = scmp.eq.s32.totalorder %s44, 0
      %p446 = por %p444, %p445
      %p447 = scmp.ne.s32.totalorder %s435, %s436
      %p448 = scmp.eq.s32.totalorder %s45, 1
      %p449 = por %p447, %p448
      %p451 = scmp.ne.s32.totalorder %s436, %s450
      %p452 = scmp.eq.s32.totalorder %s45, 0
      %p453 = por %p451, %p452
      %s455 = sadd.s32 %s454, 1
      %p458 = scmp.eq.s32.totalorder %s39, 1
      %p459 = scmp.ne.s32.totalorder %s454, %s456
      %p460 = scmp.eq.s32.totalorder %s39, 0
      %p461 = por %p459, %p460
      %p462 = scmp.ne.s32.totalorder %s454, %s456
      %p463 = scmp.eq.s32.totalorder %s44, 1
      %p464 = por %p462, %p463
      %p465 = scmp.ne.s32.totalorder %s456, %s457
      %p466 = scmp.eq.s32.totalorder %s44, 0
      %p467 = por %p465, %p466
      %p468 = scmp.ne.s32.totalorder %s456, %s457
      %p469 = scmp.eq.s32.totalorder %s45, 1
      %p470 = por %p468, %p469
      %p472 = scmp.ne.s32.totalorder %s457, %s471
      %p473 = scmp.eq.s32.totalorder %s45, 0
      %p474 = por %p472, %p473
      %s475 = ssub.s32 %s46, %s58
      %s476 = ssub.s32 %s47, %s54
      %s477 = sor.u32 %s475, %s476
      %p478 = scmp.eq.s32.totalorder %s477, 0
      %s480 = sadd.s32 %s479, 1
      %s481 = scalar_select %p478, %s479, %s480
      %p484 = pneg %p478
      %p485 = scmp.eq.s32.totalorder %s39, 1
      %p486 = por %p484, %p485
      %p487 = scmp.ne.s32.totalorder %s479, %s482
      %p488 = scmp.eq.s32.totalorder %s39, 0
      %p489 = por %p487, %p488
      %p490 = scmp.ne.s32.totalorder %s479, %s482
      %p491 = scmp.eq.s32.totalorder %s44, 1
      %p492 = por %p490, %p491
      %p493 = scmp.ne.s32.totalorder %s482, %s483
      %p494 = scmp.eq.s32.totalorder %s44, 0
      %p495 = por %p493, %p494
      %p496 = scmp.ne.s32.totalorder %s482, %s483
      %p497 = scmp.eq.s32.totalorder %s45, 1
      %p498 = por %p496, %p497
      %p500 = scmp.ne.s32.totalorder %s483, %s499
      %p501 = scmp.eq.s32.totalorder %s45, 0
      %p502 = por %p500, %p501
      %s503 = ssub.s32 %s46, %s58
      %s504 = ssub.s32 %s47, %s54
      %s505 = sor.u32 %s503, %s504
      %p506 = scmp.eq.s32.totalorder %s505, 0
      %s508 = sadd.s32 %s507, 1
      %s509 = scalar_select %p506, %s507, %s508
      %p512 = pneg %p506
      %p513 = scmp.eq.s32.totalorder %s39, 1
      %p514 = por %p512, %p513
      %p515 = scmp.ne.s32.totalorder %s507, %s510
      %p516 = scmp.eq.s32.totalorder %s39, 0
      %p517 = por %p515, %p516
      %p518 = scmp.ne.s32.totalorder %s507, %s510
      %p519 = scmp.eq.s32.totalorder %s44, 1
      %p520 = por %p518, %p519
      %p521 = scmp.ne.s32.totalorder %s510, %s511
      %p522 = scmp.eq.s32.totalorder %s44, 0
      %p523 = por %p521, %p522
      %p524 = scmp.ne.s32.totalorder %s510, %s511
      %p525 = scmp.eq.s32.totalorder %s45, 1
      %p526 = por %p524, %p525
      %p528 = scmp.ne.s32.totalorder %s511, %s527
      %p529 = scmp.eq.s32.totalorder %s45, 0
      %p530 = por %p528, %p529
      %p531 = scmp.le.s32.totalorder 1, %s39
      %p532 = scmp.lt.s32.totalorder %s39, 3
      %p533 = pnand %p531, %p532
      %p534 = pneg %p533
      // Predicated region
      $region9: #{tpu_custom_call.1} parent=5 // pred_check
        _
      $region10: #{tpu_custom_call.1} parent=5 // pred_check_branch
        %536 = sbr.rel (%p533) target = $region12
      $region11: #{tpu_custom_call.1} parent=5 // pred_region
        %s537 = ssub.s32 %s39, 1
        // Predicated region
        $region13: #{tpu_custom_call.1} parent=11 // pred_check
          %p538 = pneg %p152
        $region14: #{tpu_custom_call.1} parent=11 // pred_check_branch
          %540 = sbr.rel (%p538) target = $region16
        $region15: #{tpu_custom_call.1} parent=11 // pred_region
          _
        $region16: #{tpu_custom_call.1} parent=11 // pred_fallthru
          _
        // Predicated region
        $region17: #{tpu_custom_call.1} parent=11 // pred_check
          %p541 = pneg %p173
        $region18: #{tpu_custom_call.1} parent=11 // pred_check_branch
          %543 = sbr.rel (%p541) target = $region20
        $region19: #{tpu_custom_call.1} parent=11 // pred_region
          %s545 = ssub.s32 16, 16
          %546 = vsyncadd [#allocation7], %s545
          %s548 = sshll.u32 [#allocation6], 4
          %s549 = int_to_ptr.vmem [resolvable:$true] %s548
          %551 = dma.hbm_to_vmem [thread:$0]  %s4, 16, %s549, [#allocation7]
        $region20: #{tpu_custom_call.1} parent=11 // pred_fallthru
          _
        // Predicated region
        $region21: #{tpu_custom_call.1} parent=11 // pred_check
          %p552 = pneg %p194
        $region22: #{tpu_custom_call.1} parent=11 // pred_check_branch
          %554 = sbr.rel (%p552) target = $region24
        $region23: #{tpu_custom_call.1} parent=11 // pred_region
          %s556 = ssub.s32 256, 256
          %557 = vsyncadd [#allocation7], %s556
          %s558 = sshll.u32 [#allocation8], 4
          %s559 = int_to_ptr.vmem [resolvable:$true] %s558
          %564 = dma.hbm_to_vmem [thread:$0]  %s5, 256, %s559, [#allocation7], 64, 64, 4
        $region24: #{tpu_custom_call.1} parent=11 // pred_fallthru
          _
        // Predicated region
        $region25: #{tpu_custom_call.1} parent=11 // pred_check
          %p565 = pneg %p215
        $region26: #{tpu_custom_call.1} parent=11 // pred_check_branch
          %567 = sbr.rel (%p565) target = $region28
        $region27: #{tpu_custom_call.1} parent=11 // pred_region
          %s569 = ssub.s32 16, 16
          %570 = vsyncadd [#allocation10], %s569
          %s572 = sshll.u32 [#allocation9], 4
          %s573 = int_to_ptr.vmem [resolvable:$true] %s572
          %575 = dma.hbm_to_vmem [thread:$0]  %s6, 16, %s573, [#allocation10]
        $region28: #{tpu_custom_call.1} parent=11 // pred_fallthru
          _
        // Predicated region
        $region29: #{tpu_custom_call.1} parent=11 // pred_check
          %p576 = pneg %p236
        $region30: #{tpu_custom_call.1} parent=11 // pred_check_branch
          %578 = sbr.rel (%p576) target = $region32
        $region31: #{tpu_custom_call.1} parent=11 // pred_region
          %s580 = ssub.s32 256, 256
          %581 = vsyncadd [#allocation10], %s580
          %s582 = sshll.u32 [#allocation11], 4
          %s583 = int_to_ptr.vmem [resolvable:$true] %s582
          %588 = dma.hbm_to_vmem [thread:$0]  %s7, 256, %s583, [#allocation10], 64, 64, 4
        $region32: #{tpu_custom_call.1} parent=11 // pred_fallthru
          _
        // Predicated region
        $region33: #{tpu_custom_call.1} parent=11 // pred_check
          %p589 = pneg %p257
        $region34: #{tpu_custom_call.1} parent=11 // pred_check_branch
          %591 = sbr.rel (%p589) target = $region36
        $region35: #{tpu_custom_call.1} parent=11 // pred_region
          %s593 = ssub.s32 16, 16
          %594 = vsyncadd [#allocation13], %s593
          %s596 = sshll.u32 [#allocation12], 4
          %s597 = int_to_ptr.vmem [resolvable:$true] %s596
          %599 = dma.hbm_to_vmem [thread:$0]  %s8, 16, %s597, [#allocation13]
        $region36: #{tpu_custom_call.1} parent=11 // pred_fallthru
          _
        // Predicated region
        $region37: #{tpu_custom_call.1} parent=11 // pred_check
          %p600 = pneg %p278
        $region38: #{tpu_custom_call.1} parent=11 // pred_check_branch
          %602 = sbr.rel (%p600) target = $region40
        $region39: #{tpu_custom_call.1} parent=11 // pred_region
          _
        $region40: #{tpu_custom_call.1} parent=11 // pred_fallthru
          _
        // Predicated region
        $region41: #{tpu_custom_call.1} parent=11 // pred_check
          %p603 = pneg %p299
        $region42: #{tpu_custom_call.1} parent=11 // pred_check_branch
          %605 = sbr.rel (%p603) target = $region44
        $region43: #{tpu_custom_call.1} parent=11 // pred_region
          _
        $region44: #{tpu_custom_call.1} parent=11 // pred_fallthru
          _
        // Predicated region
        $region45: #{tpu_custom_call.1} parent=11 // pred_check
          %p606 = pneg %p320
        $region46: #{tpu_custom_call.1} parent=11 // pred_check_branch
          %608 = sbr.rel (%p606) target = $region48
        $region47: #{tpu_custom_call.1} parent=11 // pred_region
          _
        $region48: #{tpu_custom_call.1} parent=11 // pred_fallthru
          _
        // Predicated region
        $region49: #{tpu_custom_call.1} parent=11 // pred_check
          %p609 = pneg %p341
        $region50: #{tpu_custom_call.1} parent=11 // pred_check_branch
          %611 = sbr.rel (%p609) target = $region52
        $region51: #{tpu_custom_call.1} parent=11 // pred_region
          _
        $region52: #{tpu_custom_call.1} parent=11 // pred_fallthru
          _
        // Predicated region
        $region53: #{tpu_custom_call.1} parent=11 // pred_check
          %p612 = pneg %p362
        $region54: #{tpu_custom_call.1} parent=11 // pred_check_branch
          %614 = sbr.rel (%p612) target = $region56
        $region55: #{tpu_custom_call.1} parent=11 // pred_region
          _
        $region56: #{tpu_custom_call.1} parent=11 // pred_fallthru
          _
        // Predicated region
        $region57: #{tpu_custom_call.1} parent=11 // pred_check
          %p615 = pneg %p383
        $region58: #{tpu_custom_call.1} parent=11 // pred_check_branch
          %617 = sbr.rel (%p615) target = $region60
        $region59: #{tpu_custom_call.1} parent=11 // pred_region
          _
        $region60: #{tpu_custom_call.1} parent=11 // pred_fallthru
          _
        // Predicated region
        $region61: #{tpu_custom_call.1} parent=11 // pred_check
          %p618 = pneg %p404
        $region62: #{tpu_custom_call.1} parent=11 // pred_check_branch
          %620 = sbr.rel (%p618) target = $region64
        $region63: #{tpu_custom_call.1} parent=11 // pred_region
          %s622 = ssub.s32 256, 256
          %623 = vsyncadd [#allocation13], %s622
          %s624 = sshll.u32 [#allocation14], 4
          %s625 = int_to_ptr.vmem [resolvable:$true] %s624
          %630 = dma.hbm_to_vmem [thread:$0]  %s15, 256, %s625, [#allocation13], 64, 64, 4
        $region64: #{tpu_custom_call.1} parent=11 // pred_fallthru
          _
        // Predicated region
        $region65: #{tpu_custom_call.1} parent=11 // pred_check
          %p631 = pneg %p425
        $region66: #{tpu_custom_call.1} parent=11 // pred_check_branch
          %633 = sbr.rel (%p631) target = $region68
        $region67: #{tpu_custom_call.1} parent=11 // pred_region
          _
        $region68: #{tpu_custom_call.1} parent=11 // pred_fallthru
          _
        // Predicated region
        $region69: #{tpu_custom_call.1} parent=11 // pred_check
          %p634 = pneg %p446
        $region70: #{tpu_custom_call.1} parent=11 // pred_check_branch
          %636 = sbr.rel (%p634) target = $region72
        $region71: #{tpu_custom_call.1} parent=11 // pred_region
          _
        $region72: #{tpu_custom_call.1} parent=11 // pred_fallthru
          _
        // Predicated region
        $region73: #{tpu_custom_call.1} parent=11 // pred_check
          %p637 = pneg %p467
        $region74: #{tpu_custom_call.1} parent=11 // pred_check_branch
          %639 = sbr.rel (%p637) target = $region76
        $region75: #{tpu_custom_call.1} parent=11 // pred_region
          _
        $region76: #{tpu_custom_call.1} parent=11 // pred_fallthru
          _
      $region12: #{tpu_custom_call.1} parent=5 // pred_fallthru
        _
      %p640 = scmp.lt.s32.totalorder %s39, 2
      // Predicated region
      $region77: #{tpu_custom_call.1} parent=5 // pred_check
        %p641 = pneg %p640
      $region78: #{tpu_custom_call.1} parent=5 // pred_check_branch
        %643 = sbr.rel (%p641) target = $region80
      $region79: #{tpu_custom_call.1} parent=5 // pred_region
        // Predicated region
        $region81: #{tpu_custom_call.1} parent=79 // pred_check
          %p644 = pneg %p73
        $region82: #{tpu_custom_call.1} parent=79 // pred_check_branch
          %646 = sbr.rel (%p644) target = $region84
        $region83: #{tpu_custom_call.1} parent=79 // pred_region
          %p647 = scmp.lt.s32.totalorder %s46, 1
          %s648 = scalar_select %p647, %s46, 1
          %p649 = scmp.lt.s32.totalorder %s47, 0
          %s650 = scalar_select %p649, %s47, 0
          %s651 = sadd.s32 %s650, %s648
          %s652 = smul.addr %s651, 8
          %s653 = scalar_lea.vmem %s0, %s652
        $region84: #{tpu_custom_call.1} parent=79 // pred_fallthru
          _
        // Predicated region
        $region85: #{tpu_custom_call.1} parent=79 // pred_check
          %p654 = pneg %p99
        $region86: #{tpu_custom_call.1} parent=79 // pred_check_branch
          %656 = sbr.rel (%p654) target = $region88
        $region87: #{tpu_custom_call.1} parent=79 // pred_region
          %p657 = scmp.lt.s32.totalorder %s46, 1
          %s658 = scalar_select %p657, %s46, 1
          %s659 = smul.addr %s658, 8
          %s660 = scalar_lea.vmem %s1, %s659
        $region88: #{tpu_custom_call.1} parent=79 // pred_fallthru
          _
        // Predicated region
        $region89: #{tpu_custom_call.1} parent=79 // pred_check
          %p661 = pneg %p125
        $region90: #{tpu_custom_call.1} parent=79 // pred_check_branch
          %663 = sbr.rel (%p661) target = $region92
        $region91: #{tpu_custom_call.1} parent=79 // pred_region
          %s664 = sand.u32 %s115, 1
          %s665 = scalar_lea.sflag [#allocation4], %s664
          %s666 = sand.u32 %s115, 1
          %s667 = scalar_lea.vmem [#allocation3], %s666
          %s669 = ssub.s32 16, 16
          %670 = vsyncadd %s665, %s669
          %s671 = smul.addr %s46, 16
          %s672 = scalar_lea.hbm %s2, %s671
          %s674 = sshll.u32 %s667, 4
          %s675 = int_to_ptr.vmem [resolvable:$true] %s674
          %677 = dma.hbm_to_vmem [thread:$0]  %s672, 16, %s675, %s665
        $region92: #{tpu_custom_call.1} parent=79 // pred_fallthru
          _
      $region80: #{tpu_custom_call.1} parent=5 // pred_fallthru
        _
      %p678 = scmp.le.s32.totalorder 1, %s39
      %p679 = scmp.lt.s32.totalorder %s39, 3
      %p680 = pnand %p678, %p679
      %p681 = pneg %p680
      // Predicated region
      $region93: #{tpu_custom_call.1} parent=5 // pred_check
        _
      $region94: #{tpu_custom_call.1} parent=5 // pred_check_branch
        %683 = sbr.rel (%p680) target = $region96
      $region95: #{tpu_custom_call.1} parent=5 // pred_region
        %s684 = ssub.s32 %s39, 1
        %s685 = sand.u32 %s118, 1
        %s686 = scalar_lea.sflag [#allocation4], %s685
        %s687 = sand.u32 %s118, 1
        %s688 = scalar_lea.vmem [#allocation3], %s687
        // Predicated region
        $region97: #{tpu_custom_call.1} parent=95 // pred_check
          %p689 = pneg %p131
        $region98: #{tpu_custom_call.1} parent=95 // pred_check_branch
          %691 = sbr.rel (%p689) target = $region100
        $region99: #{tpu_custom_call.1} parent=95 // pred_region
          %692 = dma.done %s686, 16
        $region100: #{tpu_custom_call.1} parent=95 // pred_fallthru
          _
        // Predicated region
        $region101: #{tpu_custom_call.1} parent=95 // pred_check
          %p693 = pneg %p173
        $region102: #{tpu_custom_call.1} parent=95 // pred_check_branch
          %695 = sbr.rel (%p693) target = $region104
        $region103: #{tpu_custom_call.1} parent=95 // pred_region
          %696 = dma.done [#allocation7], 16
        $region104: #{tpu_custom_call.1} parent=95 // pred_fallthru
          _
        // Predicated region
        $region105: #{tpu_custom_call.1} parent=95 // pred_check
          %p697 = pneg %p194
        $region106: #{tpu_custom_call.1} parent=95 // pred_check_branch
          %699 = sbr.rel (%p697) target = $region108
        $region107: #{tpu_custom_call.1} parent=95 // pred_region
          %700 = dma.done [#allocation7], 256
        $region108: #{tpu_custom_call.1} parent=95 // pred_fallthru
          _
        // Predicated region
        $region109: #{tpu_custom_call.1} parent=95 // pred_check
          %p701 = pneg %p215
        $region110: #{tpu_custom_call.1} parent=95 // pred_check_branch
          %703 = sbr.rel (%p701) target = $region112
        $region111: #{tpu_custom_call.1} parent=95 // pred_region
          %704 = dma.done [#allocation10], 16
        $region112: #{tpu_custom_call.1} parent=95 // pred_fallthru
          _
        // Predicated region
        $region113: #{tpu_custom_call.1} parent=95 // pred_check
          %p705 = pneg %p236
        $region114: #{tpu_custom_call.1} parent=95 // pred_check_branch
          %707 = sbr.rel (%p705) target = $region116
        $region115: #{tpu_custom_call.1} parent=95 // pred_region
          %708 = dma.done [#allocation10], 256
        $region116: #{tpu_custom_call.1} parent=95 // pred_fallthru
          _
        // Predicated region
        $region117: #{tpu_custom_call.1} parent=95 // pred_check
          %p709 = pneg %p257
        $region118: #{tpu_custom_call.1} parent=95 // pred_check_branch
          %711 = sbr.rel (%p709) target = $region120
        $region119: #{tpu_custom_call.1} parent=95 // pred_region
          %712 = dma.done [#allocation13], 16
        $region120: #{tpu_custom_call.1} parent=95 // pred_fallthru
          _
        // Predicated region
        $region121: #{tpu_custom_call.1} parent=95 // pred_check
          %p713 = pneg %p404
        $region122: #{tpu_custom_call.1} parent=95 // pred_check_branch
          %715 = sbr.rel (%p713) target = $region124
        $region123: #{tpu_custom_call.1} parent=95 // pred_region
          %716 = dma.done [#allocation13], 256
        $region124: #{tpu_custom_call.1} parent=95 // pred_fallthru
          _
        %p717 = scmp.lt.s32.totalorder %s48, 1
        %s718 = scalar_select %p717, %s48, 1
        %p719 = scmp.lt.s32.totalorder %s49, 0
        %s720 = scalar_select %p719, %s49, 0
        %s721 = sadd.s32 %s720, %s718
        %s722 = smul.addr %s721, 8
        %s723 = scalar_lea.vmem %s0, %s722
        %p724 = pneg %p79
        %p725 = pneg %p76
        %p726 = scmp.lt.s32.totalorder %s48, 1
        %s727 = scalar_select %p726, %s48, 1
        %s728 = smul.addr %s727, 8
        %s729 = scalar_lea.vmem %s1, %s728
        %p730 = pneg %p105
        %p731 = pneg %p102
        %s732 = sand.u32 %s118, 1
        %s733 = scalar_lea.sflag [#allocation4], %s732
        %s734 = sand.u32 %s118, 1
        %s735 = scalar_lea.vmem [#allocation3], %s734
        %p736 = pneg %p131
        %p737 = pneg %p128
        %p738 = pneg %p152
        %p739 = pneg %p149
        %p740 = pneg %p173
        %p741 = pneg %p170
        %p742 = pneg %p194
        %p743 = pneg %p191
        %p744 = pneg %p215
        %p745 = pneg %p212
        %p746 = pneg %p236
        %p747 = pneg %p233
        %p748 = pneg %p257
        %p749 = pneg %p254
        %p750 = pneg %p278
        %p751 = pneg %p275
        %p752 = pneg %p299
        %p753 = pneg %p296
        %p754 = pneg %p320
        %p755 = pneg %p317
        %p756 = pneg %p341
        %p757 = pneg %p338
        %p758 = pneg %p362
        %p759 = pneg %p359
        %p760 = pneg %p383
        %p761 = pneg %p380
        %p762 = pneg %p404
        %p763 = pneg %p401
        %p764 = pneg %p425
        %p765 = pneg %p422
        %p766 = pneg %p446
        %p767 = pneg %p443
        %p768 = pneg %p467
        %p769 = pneg %p464
        %p770 = pneg %p495
        %p771 = pneg %p492
        %s772 = sand.u32 %s482, 1
        %s773 = scalar_lea.sflag [#allocation5], %s772
        %s774 = sand.u32 %s482, 1
        %s775 = smul.addr %s774, 8
        %s776 = scalar_lea.vmem [#allocation15], %s775
        %p777 = pneg %p523
        %p778 = pneg %p520
        %s779 = sand.u32 %s510, 1
        %s780 = scalar_lea.sflag [#allocation17], %s779
        %s781 = sand.u32 %s510, 1
        %s782 = smul.addr %s781, 32
        %s783 = scalar_lea.vmem [#allocation16], %s782
        %p784 = scmp.lt.s32.totalorder %s48, 1
        %s785 = scalar_select %p784, %s48, 1
        %p786 = scmp.lt.s32.totalorder %s49, 0
        %s787 = scalar_select %p786, %s49, 0
        %s788 = sadd.s32 %s787, %s785
        %s789 = smul.addr %s788, 8
        %s790 = scalar_lea.vmem %s0, %s789
        %p791 = scmp.lt.s32.totalorder %s48, 1
        %s792 = scalar_select %p791, %s48, 1
        %s793 = smul.addr %s792, 8
        %s794 = scalar_lea.vmem %s1, %s793
        %v796 = vld [vmem:[%s790] sm:$0xff]
        %v797 = vpack.c.bf16 %v796, %v796
        %v798 = vld [vmem:[%s794] sm:$0xff]
        %v799 = vpack.c.bf16 %v798, %v798
        %v800 = vld [vmem:[%s3] sm:$0xf]
        %v801 = vld [vmem:[%s3 + $0x4] sm:$0xf]
        %v802 = vld [vmem:[%s3 + $0x8] sm:$0xf]
        %v803 = vld [vmem:[%s3 + $0xc] sm:$0xf]
        %v804 = vld [vmem:[#allocation6] sm:$0x1]
        %v806 = vlaneseq
        %v807 = vshrl.u32 %v806, 7
        %v808 = vsub.s32 0, %v807
        %v809 = vrot.slane %v804, %v808
        %v815 = vunpack.c.l.b16 %v800
        %v816 = vunpack.c.l.b16 %v801
        %v817 = vunpack.c.l.b16 %v802
        %v818 = vunpack.c.l.b16 %v803
        %v819 = vpack.c.b16 %v816, %v815
        %v820 = vpack.c.b16 %v818, %v817
        %vm823 = vcmask 261120
        %v825 = vsel %vm823, %v797, 0
        %827 = vmatprep.subr.bf16.mxu0 0
        %828 = vmatpush1.bf16.msra.mxu0 0
        %829 = vmatprep.subr.bf16.mxu0 0
        %830 = vmatpush1.bf16.msra.mxu0 0
        %831 = vmatprep.subr.bf16.mxu0 0
        %832 = vmatpush1.bf16.msra.mxu0 0
        %833 = vmatprep.subr.bf16.mxu0 0
        %834 = vmatpush1.bf16.msra.mxu0 0
        %835 = vmatprep.subr.bf16.mxu0 0
        %836 = vmatpush1.bf16.msra.mxu0 0
        %837 = vmatprep.subr.bf16.mxu0 0
        %838 = vmatpush1.bf16.msra.mxu0 0
        %839 = vmatprep.subr.bf16.mxu0 0
        %840 = vmatpush1.bf16.msra.mxu0 %v820
        %841 = vmatprep.subr.bf16.mxu0 0
        %842 = vmatpush1.bf16.msra.mxu0 %v819
        %843 = vmatprep.subr.bf16.mxu0 0
        %844 = vmatpush2.bf16.msra.mxu0 0
        %845 = vmatprep.subr.bf16.mxu0 0
        %846 = vmatpush2.bf16.msra.mxu0 0
        %847 = vmatprep.subr.bf16.mxu0 0
        %848 = vmatpush2.bf16.msra.mxu0 0
        %849 = vmatprep.subr.bf16.mxu0 0
        %850 = vmatpush2.bf16.msra.mxu0 0
        %851 = vmatprep.subr.bf16.mxu0 0
        %852 = vmatpush2.bf16.msra.mxu0 0
        %853 = vmatprep.subr.bf16.mxu0 0
        %854 = vmatpush2.bf16.msra.mxu0 0
        %855 = vmatprep.subr.bf16.mxu0 0
        %856 = vmatpush2.bf16.msra.mxu0 0
        %857 = vmatprep.subr.bf16.mxu0 0
        %858 = vmatpush2.bf16.msra.mxu0 0
        %859 = vmatprep.mubr.bf16.mxu0 0
        %860 = vmatmul.mubr.bf16.gmra.mxu0 %v825
        %v861 = vpop.f32.mrf.mxu0
        %v862 = vadd.f32 %v809, %v861
        %v863 = vpop.f32.mrf.mxu0
        %v864 = vpop.f32.mrf.mxu0
        %v865 = vpop.f32.mrf.mxu0
        %866 = vdwg.mxu0
        %v867 = vld [vmem:[#allocation8] sm:$0xf]
        %v868 = vld [vmem:[#allocation8 + $0x4] sm:$0xf]
        %v869 = vld [vmem:[#allocation8 + $0x8] sm:$0xf]
        %v870 = vld [vmem:[#allocation8 + $0xc] sm:$0xf]
        %v871 = vld [vmem:[#allocation9] sm:$0x1]
        %v873 = vlaneseq
        %v874 = vshrl.u32 %v873, 7
        %v875 = vsub.s32 0, %v874
        %v876 = vrot.slane %v871, %v875
        %v882 = vunpack.c.l.b16 %v867
        %v883 = vunpack.c.l.b16 %v868
        %v884 = vunpack.c.l.b16 %v869
        %v885 = vunpack.c.l.b16 %v870
        %v886 = vpack.c.b16 %v883, %v882
        %v887 = vpack.c.b16 %v885, %v884
        %v891 = vsel %vm823, %v799, 0
        %893 = vmatprep.subr.bf16.mxu0 0
        %894 = vmatpush1.bf16.msra.mxu0 0
        %895 = vmatprep.subr.bf16.mxu0 0
        %896 = vmatpush1.bf16.msra.mxu0 0
        %897 = vmatprep.subr.bf16.mxu0 0
        %898 = vmatpush1.bf16.msra.mxu0 0
        %899 = vmatprep.subr.bf16.mxu0 0
        %900 = vmatpush1.bf16.msra.mxu0 0
        %901 = vmatprep.subr.bf16.mxu0 0
        %902 = vmatpush1.bf16.msra.mxu0 0
        %903 = vmatprep.subr.bf16.mxu0 0
        %904 = vmatpush1.bf16.msra.mxu0 0
        %905 = vmatprep.subr.bf16.mxu0 0
        %906 = vmatpush1.bf16.msra.mxu0 %v887
        %907 = vmatprep.subr.bf16.mxu0 0
        %908 = vmatpush1.bf16.msra.mxu0 %v886
        %909 = vmatprep.subr.bf16.mxu0 0
        %910 = vmatpush2.bf16.msra.mxu0 0
        %911 = vmatprep.subr.bf16.mxu0 0
        %912 = vmatpush2.bf16.msra.mxu0 0
        %913 = vmatprep.subr.bf16.mxu0 0
        %914 = vmatpush2.bf16.msra.mxu0 0
        %915 = vmatprep.subr.bf16.mxu0 0
        %916 = vmatpush2.bf16.msra.mxu0 0
        %917 = vmatprep.subr.bf16.mxu0 0
        %918 = vmatpush2.bf16.msra.mxu0 0
        %919 = vmatprep.subr.bf16.mxu0 0
        %920 = vmatpush2.bf16.msra.mxu0 0
        %921 = vmatprep.subr.bf16.mxu0 0
        %922 = vmatpush2.bf16.msra.mxu0 0
        %923 = vmatprep.subr.bf16.mxu0 0
        %924 = vmatpush2.bf16.msra.mxu0 0
        %925 = vmatprep.mubr.bf16.mxu0 0
        %926 = vmatmul.mubr.bf16.gmra.mxu0 %v891
        %v927 = vpop.f32.mrf.mxu0
        %v928 = vadd.f32 %v876, %v927
        %v929 = vpop.f32.mrf.mxu0
        %v930 = vpop.f32.mrf.mxu0
        %v931 = vpop.f32.mrf.mxu0
        %932 = vdwg.mxu0
        %v933 = vld [vmem:[#allocation11] sm:$0xf]
        %v934 = vld [vmem:[#allocation11 + $0x4] sm:$0xf]
        %v935 = vld [vmem:[#allocation11 + $0x8] sm:$0xf]
        %v936 = vld [vmem:[#allocation11 + $0xc] sm:$0xf]
        %v937 = vld [vmem:[#allocation12] sm:$0x1]
        %v939 = vlaneseq
        %v940 = vshrl.u32 %v939, 7
        %v941 = vsub.s32 0, %v940
        %v942 = vrot.slane %v937, %v941
        %v948 = vunpack.c.l.b16 %v933
        %v949 = vunpack.c.l.b16 %v934
        %v950 = vunpack.c.l.b16 %v935
        %v951 = vunpack.c.l.b16 %v936
        %v952 = vpack.c.b16 %v949, %v948
        %v953 = vpack.c.b16 %v951, %v950
        %956 = vmatprep.subr.bf16.mxu0 0
        %957 = vmatpush1.bf16.msra.mxu0 0
        %958 = vmatprep.subr.bf16.mxu0 0
        %959 = vmatpush1.bf16.msra.mxu0 0
        %960 = vmatprep.subr.bf16.mxu0 0
        %961 = vmatpush1.bf16.msra.mxu0 0
        %962 = vmatprep.subr.bf16.mxu0 0
        %963 = vmatpush1.bf16.msra.mxu0 0
        %964 = vmatprep.subr.bf16.mxu0 0
        %965 = vmatpush1.bf16.msra.mxu0 0
        %966 = vmatprep.subr.bf16.mxu0 0
        %967 = vmatpush1.bf16.msra.mxu0 0
        %968 = vmatprep.subr.bf16.mxu0 0
        %969 = vmatpush1.bf16.msra.mxu0 %v953
        %970 = vmatprep.subr.bf16.mxu0 0
        %971 = vmatpush1.bf16.msra.mxu0 %v952
        %972 = vmatprep.subr.bf16.mxu0 0
        %973 = vmatpush2.bf16.msra.mxu0 0
        %974 = vmatprep.subr.bf16.mxu0 0
        %975 = vmatpush2.bf16.msra.mxu0 0
        %976 = vmatprep.subr.bf16.mxu0 0
        %977 = vmatpush2.bf16.msra.mxu0 0
        %978 = vmatprep.subr.bf16.mxu0 0
        %979 = vmatpush2.bf16.msra.mxu0 0
        %980 = vmatprep.subr.bf16.mxu0 0
        %981 = vmatpush2.bf16.msra.mxu0 0
        %982 = vmatprep.subr.bf16.mxu0 0
        %983 = vmatpush2.bf16.msra.mxu0 0
        %984 = vmatprep.subr.bf16.mxu0 0
        %985 = vmatpush2.bf16.msra.mxu0 0
        %986 = vmatprep.subr.bf16.mxu0 0
        %987 = vmatpush2.bf16.msra.mxu0 0
        %988 = vmatprep.mubr.bf16.mxu0 0
        %989 = vmatmul.mubr.bf16.gmra.mxu0 %v891
        %v990 = vpop.f32.mrf.mxu0
        %v991 = vadd.f32 %v942, %v990
        %v992 = vpop.f32.mrf.mxu0
        %v993 = vpop.f32.mrf.mxu0
        %v994 = vpop.f32.mrf.mxu0
        %995 = vdwg.mxu0
        %v996 = vld [vmem:[%s688] sm:$0x1]
        %v998 = vlaneseq
        %v999 = vshrl.u32 %v998, 7
        %v1000 = vsub.s32 0, %v999
        %v1001 = vrot.slane %v996, %v1000
        %vm1003 = vcmask 64512
        %v1005 = vsel %vm1003, %v862, 0
        %v1008 = vsel %vm1003, %v928, 0
        %1010 = vmatprep.subr.mxu0 0.0
        %1011 = vmatpush1.xpose.msra.mxu0 0.0
        %1012 = vmatprep.subr.mxu0 0.0
        %1013 = vmatpush1.xpose.msra.mxu0 0.0
        %1014 = vmatprep.subr.mxu0 0.0
        %1015 = vmatpush1.xpose.msra.mxu0 0.0
        %1016 = vmatprep.subr.mxu0 0.0
        %1017 = vmatpush1.xpose.msra.mxu0 0.0
        %1018 = vmatprep.subr.mxu0 0.0
        %1019 = vmatpush1.xpose.msra.mxu0 0.0
        %1020 = vmatprep.subr.mxu0 0.0
        %1021 = vmatpush1.xpose.msra.mxu0 0.0
        %1022 = vmatprep.subr.mxu0 0.0
        %1023 = vmatpush1.xpose.msra.mxu0 0.0
        %1024 = vmatprep.subr.mxu0 0.0
        %1025 = vmatpush1.xpose.msra.mxu0 0.0
        %1026 = vmatprep.subr.mxu0 0.0
        %1027 = vmatpush1.xpose.msra.mxu0 0.0
        %1028 = vmatprep.subr.mxu0 0.0
        %1029 = vmatpush1.xpose.msra.mxu0 0.0
        %1030 = vmatprep.subr.mxu0 0.0
        %1031 = vmatpush1.xpose.msra.mxu0 0.0
        %1032 = vmatprep.subr.mxu0 0.0
        %1033 = vmatpush1.xpose.msra.mxu0 0.0
        %1034 = vmatprep.subr.mxu0 0.0
        %1035 = vmatpush1.xpose.msra.mxu0 0.0
        %1036 = vmatprep.subr.mxu0 0.0
        %1037 = vmatpush1.xpose.msra.mxu0 0.0
        %1038 = vmatprep.subr.mxu0 0.0
        %1039 = vmatpush1.xpose.msra.mxu0 0.0
        %1040 = vmatprep.subr.mxu0 0.0
        %1041 = vmatpush1.xpose.msra.mxu0 %v1008
        %1042 = vmatprep.subr.mxu0 0.0
        %1043 = vmatpush2.xpose.msra.mxu0 0.0
        %1044 = vmatprep.subr.mxu0 0.0
        %1045 = vmatpush2.xpose.msra.mxu0 0.0
        %1046 = vmatprep.subr.mxu0 0.0
        %1047 = vmatpush2.xpose.msra.mxu0 0.0
        %1048 = vmatprep.subr.mxu0 0.0
        %1049 = vmatpush2.xpose.msra.mxu0 0.0
        %1050 = vmatprep.subr.mxu0 0.0
        %1051 = vmatpush2.xpose.msra.mxu0 0.0
        %1052 = vmatprep.subr.mxu0 0.0
        %1053 = vmatpush2.xpose.msra.mxu0 0.0
        %1054 = vmatprep.subr.mxu0 0.0
        %1055 = vmatpush2.xpose.msra.mxu0 0.0
        %1056 = vmatprep.subr.mxu0 0.0
        %1057 = vmatpush2.xpose.msra.mxu0 0.0
        %1058 = vmatprep.subr.mxu0 0.0
        %1059 = vmatpush2.xpose.msra.mxu0 0.0
        %1060 = vmatprep.subr.mxu0 0.0
        %1061 = vmatpush2.xpose.msra.mxu0 0.0
        %1062 = vmatprep.subr.mxu0 0.0
        %1063 = vmatpush2.xpose.msra.mxu0 0.0
        %1064 = vmatprep.subr.mxu0 0.0
        %1065 = vmatpush2.xpose.msra.mxu0 0.0
        %1066 = vmatprep.subr.mxu0 0.0
        %1067 = vmatpush2.xpose.msra.mxu0 0.0
        %1068 = vmatprep.subr.mxu0 0.0
        %1069 = vmatpush2.xpose.msra.mxu0 0.0
        %1070 = vmatprep.subr.mxu0 0.0
        %1071 = vmatpush2.xpose.msra.mxu0 0.0
        %1072 = vmatprep.subr.mxu0 0.0
        %1073 = vmatpush2.xpose.msra.mxu0 0.0
        %1074 = vmatprep.mubr.f32.mxu0 0.0
        %1075 = vmatmul.mubr.f32.gmra.mxu0 %v1005
        %v1076 = vpop.f32.mrf.mxu0
        %v1077 = vadd.f32 %v1001, %v1076
        %v1078 = vpop.f32.mrf.mxu0
        %1079 = vdwg.mxu0
        %v1080 = vsel %vm1003, %v1077, -inf
        %1081 = vmax.xlane.f32.xlu0 %v1080
        %v1082 = vpop.xlane.xlu0 %1081
        %v1083 = vsub.f32 %v1077, %v1082
        %v1084 = vmul.f32 %v1083, 1.442695
        %v1085 = vpow.pop %v1084
        %v1086 = vsel %vm1003, %v1085, 0.0
        %1087 = vadd.xlane.f32.xlu0 %v1086
        %v1088 = vpop.xlane.xlu0 %1087
        %v1089 = vrcp.pop %v1088
        %v1090 = vmul.f32 %v1085, %v1089
        %1091 = vst.msk [vmem:[%s783] sm:$0xff] %vm1003, %v1090
        %v1092 = vpack.c.bf16 %v1090, %v1090
        %v1093 = vpack.c.bf16 %v991, %v991
        %v1095 = vsel %vm1003, %v1092, 0
        %vm1097 = vcmask 1043456
        %v1099 = vsel %vm1097, %v1093, 0
        %1101 = vmatprep.subr.bf16.mxu0 0
        %1102 = vmatpush1.bf16.msra.mxu0 0
        %1103 = vmatprep.subr.bf16.mxu0 0
        %1104 = vmatpush1.bf16.msra.mxu0 0
        %1105 = vmatprep.subr.bf16.mxu0 0
        %1106 = vmatpush1.bf16.msra.mxu0 0
        %1107 = vmatprep.subr.bf16.mxu0 0
        %1108 = vmatpush1.bf16.msra.mxu0 0
        %1109 = vmatprep.subr.bf16.mxu0 0
        %1110 = vmatpush1.bf16.msra.mxu0 0
        %1111 = vmatprep.subr.bf16.mxu0 0
        %1112 = vmatpush1.bf16.msra.mxu0 0
        %1113 = vmatprep.subr.bf16.mxu0 0
        %1114 = vmatpush1.bf16.msra.mxu0 0
        %1115 = vmatprep.subr.bf16.mxu0 0
        %1116 = vmatpush1.bf16.msra.mxu0 %v1099
        %1117 = vmatprep.subr.bf16.mxu0 0
        %1118 = vmatpush2.bf16.msra.mxu0 0
        %1119 = vmatprep.subr.bf16.mxu0 0
        %1120 = vmatpush2.bf16.msra.mxu0 0
        %1121 = vmatprep.subr.bf16.mxu0 0
        %1122 = vmatpush2.bf16.msra.mxu0 0
        %1123 = vmatprep.subr.bf16.mxu0 0
        %1124 = vmatpush2.bf16.msra.mxu0 0
        %1125 = vmatprep.subr.bf16.mxu0 0
        %1126 = vmatpush2.bf16.msra.mxu0 0
        %1127 = vmatprep.subr.bf16.mxu0 0
        %1128 = vmatpush2.bf16.msra.mxu0 0
        %1129 = vmatprep.subr.bf16.mxu0 0
        %1130 = vmatpush2.bf16.msra.mxu0 0
        %1131 = vmatprep.subr.bf16.mxu0 0
        %1132 = vmatpush2.bf16.msra.mxu0 0
        %1133 = vmatprep.mubr.bf16.mxu0 0
        %1134 = vmatmul.mubr.bf16.gmra.mxu0 %v1095
        %v1135 = vpop.f32.mrf.mxu0
        %v1136 = vadd.f32 0.0, %v1135
        %v1137 = vpop.f32.mrf.mxu0
        %v1138 = vpop.f32.mrf.mxu0
        %v1139 = vpop.f32.mrf.mxu0
        %1140 = vdwg.mxu0
        %1141 = vst.msk [vmem:[#allocation2] sm:$0xff] %vm1003, %v1136
        %1142 = vrot.lane.b32.xlu0 %v862, 120
        %v1143 = vpop.permute.xlu0 %1142
        %1144 = vrot.lane.b32.xlu0 %v928, 120
        %v1145 = vpop.permute.xlu0 %1144
        %v1146 = vsel %vm1003, %v1143, 0
        %v1148 = vsel %vm1003, %v1145, 0
        %1150 = vmatprep.subr.mxu0 0.0
        %1151 = vmatpush1.xpose.msra.mxu0 0.0
        %1152 = vmatprep.subr.mxu0 0.0
        %1153 = vmatpush1.xpose.msra.mxu0 0.0
        %1154 = vmatprep.subr.mxu0 0.0
        %1155 = vmatpush1.xpose.msra.mxu0 0.0
        %1156 = vmatprep.subr.mxu0 0.0
        %1157 = vmatpush1.xpose.msra.mxu0 0.0
        %1158 = vmatprep.subr.mxu0 0.0
        %1159 = vmatpush1.xpose.msra.mxu0 0.0
        %1160 = vmatprep.subr.mxu0 0.0
        %1161 = vmatpush1.xpose.msra.mxu0 0.0
        %1162 = vmatprep.subr.mxu0 0.0
        %1163 = vmatpush1.xpose.msra.mxu0 0.0
        %1164 = vmatprep.subr.mxu0 0.0
        %1165 = vmatpush1.xpose.msra.mxu0 0.0
        %1166 = vmatprep.subr.mxu0 0.0
        %1167 = vmatpush1.xpose.msra.mxu0 0.0
        %1168 = vmatprep.subr.mxu0 0.0
        %1169 = vmatpush1.xpose.msra.mxu0 0.0
        %1170 = vmatprep.subr.mxu0 0.0
        %1171 = vmatpush1.xpose.msra.mxu0 0.0
        %1172 = vmatprep.subr.mxu0 0.0
        %1173 = vmatpush1.xpose.msra.mxu0 0.0
        %1174 = vmatprep.subr.mxu0 0.0
        %1175 = vmatpush1.xpose.msra.mxu0 0.0
        %1176 = vmatprep.subr.mxu0 0.0
        %1177 = vmatpush1.xpose.msra.mxu0 0.0
        %1178 = vmatprep.subr.mxu0 0.0
        %1179 = vmatpush1.xpose.msra.mxu0 0.0
        %1180 = vmatprep.subr.mxu0 0.0
        %1181 = vmatpush1.xpose.msra.mxu0 %v1148
        %1182 = vmatprep.subr.mxu0 0.0
        %1183 = vmatpush2.xpose.msra.mxu0 0.0
        %1184 = vmatprep.subr.mxu0 0.0
        %1185 = vmatpush2.xpose.msra.mxu0 0.0
        %1186 = vmatprep.subr.mxu0 0.0
        %1187 = vmatpush2.xpose.msra.mxu0 0.0
        %1188 = vmatprep.subr.mxu0 0.0
        %1189 = vmatpush2.xpose.msra.mxu0 0.0
        %1190 = vmatprep.subr.mxu0 0.0
        %1191 = vmatpush2.xpose.msra.mxu0 0.0
        %1192 = vmatprep.subr.mxu0 0.0
        %1193 = vmatpush2.xpose.msra.mxu0 0.0
        %1194 = vmatprep.subr.mxu0 0.0
        %1195 = vmatpush2.xpose.msra.mxu0 0.0
        %1196 = vmatprep.subr.mxu0 0.0
        %1197 = vmatpush2.xpose.msra.mxu0 0.0
        %1198 = vmatprep.subr.mxu0 0.0
        %1199 = vmatpush2.xpose.msra.mxu0 0.0
        %1200 = vmatprep.subr.mxu0 0.0
        %1201 = vmatpush2.xpose.msra.mxu0 0.0
        %1202 = vmatprep.subr.mxu0 0.0
        %1203 = vmatpush2.xpose.msra.mxu0 0.0
        %1204 = vmatprep.subr.mxu0 0.0
        %1205 = vmatpush2.xpose.msra.mxu0 0.0
        %1206 = vmatprep.subr.mxu0 0.0
        %1207 = vmatpush2.xpose.msra.mxu0 0.0
        %1208 = vmatprep.subr.mxu0 0.0
        %1209 = vmatpush2.xpose.msra.mxu0 0.0
        %1210 = vmatprep.subr.mxu0 0.0
        %1211 = vmatpush2.xpose.msra.mxu0 0.0
        %1212 = vmatprep.subr.mxu0 0.0
        %1213 = vmatpush2.xpose.msra.mxu0 0.0
        %1214 = vmatprep.mubr.f32.mxu0 0.0
        %1215 = vmatmul.mubr.f32.gmra.mxu0 %v1146
        %v1216 = vpop.f32.mrf.mxu0
        %v1217 = vadd.f32 %v1001, %v1216
        %v1218 = vpop.f32.mrf.mxu0
        %1219 = vdwg.mxu0
        %v1220 = vsel %vm1003, %v1217, -inf
        %1221 = vmax.xlane.f32.xlu0 %v1220
        %v1222 = vpop.xlane.xlu0 %1221
        %v1223 = vsub.f32 %v1217, %v1222
        %v1224 = vmul.f32 %v1223, 1.442695
        %v1225 = vpow.pop %v1224
        %v1226 = vsel %vm1003, %v1225, 0.0
        %1227 = vadd.xlane.f32.xlu0 %v1226
        %v1228 = vpop.xlane.xlu0 %1227
        %v1229 = vrcp.pop %v1228
        %v1230 = vmul.f32 %v1225, %v1229
        %s1231 = scalar_lea.vmem %s783, 8 [#allocation16]
        %1232 = vst.msk [vmem:[%s1231] sm:$0xff] %vm1003, %v1230
        %v1233 = vpack.c.bf16 %v1230, %v1230
        %1235 = vrot.lane.b32.xlu0 %v1093, 120
        %v1236 = vpop.permute.xlu0 %1235
        %v1238 = vsel %vm1003, %v1233, 0
        %v1241 = vsel %vm1097, %v1236, 0
        %1243 = vmatprep.subr.bf16.mxu0 0
        %1244 = vmatpush1.bf16.msra.mxu0 0
        %1245 = vmatprep.subr.bf16.mxu0 0
        %1246 = vmatpush1.bf16.msra.mxu0 0
        %1247 = vmatprep.subr.bf16.mxu0 0
        %1248 = vmatpush1.bf16.msra.mxu0 0
        %1249 = vmatprep.subr.bf16.mxu0 0
        %1250 = vmatpush1.bf16.msra.mxu0 0
        %1251 = vmatprep.subr.bf16.mxu0 0
        %1252 = vmatpush1.bf16.msra.mxu0 0
        %1253 = vmatprep.subr.bf16.mxu0 0
        %1254 = vmatpush1.bf16.msra.mxu0 0
        %1255 = vmatprep.subr.bf16.mxu0 0
        %1256 = vmatpush1.bf16.msra.mxu0 0
        %1257 = vmatprep.subr.bf16.mxu0 0
        %1258 = vmatpush1.bf16.msra.mxu0 %v1241
        %1259 = vmatprep.subr.bf16.mxu0 0
        %1260 = vmatpush2.bf16.msra.mxu0 0
        %1261 = vmatprep.subr.bf16.mxu0 0
        %1262 = vmatpush2.bf16.msra.mxu0 0
        %1263 = vmatprep.subr.bf16.mxu0 0
        %1264 = vmatpush2.bf16.msra.mxu0 0
        %1265 = vmatprep.subr.bf16.mxu0 0
        %1266 = vmatpush2.bf16.msra.mxu0 0
        %1267 = vmatprep.subr.bf16.mxu0 0
        %1268 = vmatpush2.bf16.msra.mxu0 0
        %1269 = vmatprep.subr.bf16.mxu0 0
        %1270 = vmatpush2.bf16.msra.mxu0 0
        %1271 = vmatprep.subr.bf16.mxu0 0
        %1272 = vmatpush2.bf16.msra.mxu0 0
        %1273 = vmatprep.subr.bf16.mxu0 0
        %1274 = vmatpush2.bf16.msra.mxu0 0
        %1275 = vmatprep.mubr.bf16.mxu0 0
        %1276 = vmatmul.mubr.bf16.gmra.mxu0 %v1238
        %v1277 = vpop.f32.mrf.mxu0
        %v1278 = vadd.f32 0.0, %v1277
        %v1279 = vpop.f32.mrf.mxu0
        %v1280 = vpop.f32.mrf.mxu0
        %v1281 = vpop.f32.mrf.mxu0
        %1282 = vdwg.mxu0
        %1284 = vrot.lane.b32.xlu0 %v1278, 8
        %v1285 = vpop.permute.xlu0 %1284
        %vm1287 = vcmask 130112
        %1288 = vst.msk [vmem:[#allocation2] sm:$0xff] %vm1287, %v1285
        %1289 = vrot.lane.b32.xlu0 %v862, 112
        %v1290 = vpop.permute.xlu0 %1289
        %1291 = vrot.lane.b32.xlu0 %v928, 112
        %v1292 = vpop.permute.xlu0 %1291
        %v1293 = vsel %vm1003, %v1290, 0
        %v1295 = vsel %vm1003, %v1292, 0
        %1297 = vmatprep.subr.mxu0 0.0
        %1298 = vmatpush1.xpose.msra.mxu0 0.0
        %1299 = vmatprep.subr.mxu0 0.0
        %1300 = vmatpush1.xpose.msra.mxu0 0.0
        %1301 = vmatprep.subr.mxu0 0.0
        %1302 = vmatpush1.xpose.msra.mxu0 0.0
        %1303 = vmatprep.subr.mxu0 0.0
        %1304 = vmatpush1.xpose.msra.mxu0 0.0
        %1305 = vmatprep.subr.mxu0 0.0
        %1306 = vmatpush1.xpose.msra.mxu0 0.0
        %1307 = vmatprep.subr.mxu0 0.0
        %1308 = vmatpush1.xpose.msra.mxu0 0.0
        %1309 = vmatprep.subr.mxu0 0.0
        %1310 = vmatpush1.xpose.msra.mxu0 0.0
        %1311 = vmatprep.subr.mxu0 0.0
        %1312 = vmatpush1.xpose.msra.mxu0 0.0
        %1313 = vmatprep.subr.mxu0 0.0
        %1314 = vmatpush1.xpose.msra.mxu0 0.0
        %1315 = vmatprep.subr.mxu0 0.0
        %1316 = vmatpush1.xpose.msra.mxu0 0.0
        %1317 = vmatprep.subr.mxu0 0.0
        %1318 = vmatpush1.xpose.msra.mxu0 0.0
        %1319 = vmatprep.subr.mxu0 0.0
        %1320 = vmatpush1.xpose.msra.mxu0 0.0
        %1321 = vmatprep.subr.mxu0 0.0
        %1322 = vmatpush1.xpose.msra.mxu0 0.0
        %1323 = vmatprep.subr.mxu0 0.0
        %1324 = vmatpush1.xpose.msra.mxu0 0.0
        %1325 = vmatprep.subr.mxu0 0.0
        %1326 = vmatpush1.xpose.msra.mxu0 0.0
        %1327 = vmatprep.subr.mxu0 0.0
        %1328 = vmatpush1.xpose.msra.mxu0 %v1295
        %1329 = vmatprep.subr.mxu0 0.0
        %1330 = vmatpush2.xpose.msra.mxu0 0.0
        %1331 = vmatprep.subr.mxu0 0.0
        %1332 = vmatpush2.xpose.msra.mxu0 0.0
        %1333 = vmatprep.subr.mxu0 0.0
        %1334 = vmatpush2.xpose.msra.mxu0 0.0
        %1335 = vmatprep.subr.mxu0 0.0
        %1336 = vmatpush2.xpose.msra.mxu0 0.0
        %1337 = vmatprep.subr.mxu0 0.0
        %1338 = vmatpush2.xpose.msra.mxu0 0.0
        %1339 = vmatprep.subr.mxu0 0.0
        %1340 = vmatpush2.xpose.msra.mxu0 0.0
        %1341 = vmatprep.subr.mxu0 0.0
        %1342 = vmatpush2.xpose.msra.mxu0 0.0
        %1343 = vmatprep.subr.mxu0 0.0
        %1344 = vmatpush2.xpose.msra.mxu0 0.0
        %1345 = vmatprep.subr.mxu0 0.0
        %1346 = vmatpush2.xpose.msra.mxu0 0.0
        %1347 = vmatprep.subr.mxu0 0.0
        %1348 = vmatpush2.xpose.msra.mxu0 0.0
        %1349 = vmatprep.subr.mxu0 0.0
        %1350 = vmatpush2.xpose.msra.mxu0 0.0
        %1351 = vmatprep.subr.mxu0 0.0
        %1352 = vmatpush2.xpose.msra.mxu0 0.0
        %1353 = vmatprep.subr.mxu0 0.0
        %1354 = vmatpush2.xpose.msra.mxu0 0.0
        %1355 = vmatprep.subr.mxu0 0.0
        %1356 = vmatpush2.xpose.msra.mxu0 0.0
        %1357 = vmatprep.subr.mxu0 0.0
        %1358 = vmatpush2.xpose.msra.mxu0 0.0
        %1359 = vmatprep.subr.mxu0 0.0
        %1360 = vmatpush2.xpose.msra.mxu0 0.0
        %1361 = vmatprep.mubr.f32.mxu0 0.0
        %1362 = vmatmul.mubr.f32.gmra.mxu0 %v1293
        %v1363 = vpop.f32.mrf.mxu0
        %v1364 = vadd.f32 %v1001, %v1363
        %v1365 = vpop.f32.mrf.mxu0
        %1366 = vdwg.mxu0
        %v1367 = vsel %vm1003, %v1364, -inf
        %1368 = vmax.xlane.f32.xlu0 %v1367
        %v1369 = vpop.xlane.xlu0 %1368
        %v1370 = vsub.f32 %v1364, %v1369
        %v1371 = vmul.f32 %v1370, 1.442695
        %v1372 = vpow.pop %v1371
        %v1373 = vsel %vm1003, %v1372, 0.0
        %1374 = vadd.xlane.f32.xlu0 %v1373
        %v1375 = vpop.xlane.xlu0 %1374
        %v1376 = vrcp.pop %v1375
        %v1377 = vmul.f32 %v1372, %v1376
        %s1378 = scalar_lea.vmem %s783, 16 [#allocation16]
        %1379 = vst.msk [vmem:[%s1378] sm:$0xff] %vm1003, %v1377
        %v1380 = vpack.c.bf16 %v1377, %v1377
        %1381 = vrot.lane.b32.xlu0 %v1093, 112
        %v1382 = vpop.permute.xlu0 %1381
        %v1384 = vsel %vm1003, %v1380, 0
        %v1387 = vsel %vm1097, %v1382, 0
        %1389 = vmatprep.subr.bf16.mxu0 0
        %1390 = vmatpush1.bf16.msra.mxu0 0
        %1391 = vmatprep.subr.bf16.mxu0 0
        %1392 = vmatpush1.bf16.msra.mxu0 0
        %1393 = vmatprep.subr.bf16.mxu0 0
        %1394 = vmatpush1.bf16.msra.mxu0 0
        %1395 = vmatprep.subr.bf16.mxu0 0
        %1396 = vmatpush1.bf16.msra.mxu0 0
        %1397 = vmatprep.subr.bf16.mxu0 0
        %1398 = vmatpush1.bf16.msra.mxu0 0
        %1399 = vmatprep.subr.bf16.mxu0 0
        %1400 = vmatpush1.bf16.msra.mxu0 0
        %1401 = vmatprep.subr.bf16.mxu0 0
        %1402 = vmatpush1.bf16.msra.mxu0 0
        %1403 = vmatprep.subr.bf16.mxu0 0
        %1404 = vmatpush1.bf16.msra.mxu0 %v1387
        %1405 = vmatprep.subr.bf16.mxu0 0
        %1406 = vmatpush2.bf16.msra.mxu0 0
        %1407 = vmatprep.subr.bf16.mxu0 0
        %1408 = vmatpush2.bf16.msra.mxu0 0
        %1409 = vmatprep.subr.bf16.mxu0 0
        %1410 = vmatpush2.bf16.msra.mxu0 0
        %1411 = vmatprep.subr.bf16.mxu0 0
        %1412 = vmatpush2.bf16.msra.mxu0 0
        %1413 = vmatprep.subr.bf16.mxu0 0
        %1414 = vmatpush2.bf16.msra.mxu0 0
        %1415 = vmatprep.subr.bf16.mxu0 0
        %1416 = vmatpush2.bf16.msra.mxu0 0
        %1417 = vmatprep.subr.bf16.mxu0 0
        %1418 = vmatpush2.bf16.msra.mxu0 0
        %1419 = vmatprep.subr.bf16.mxu0 0
        %1420 = vmatpush2.bf16.msra.mxu0 0
        %1421 = vmatprep.mubr.bf16.mxu0 0
        %1422 = vmatmul.mubr.bf16.gmra.mxu0 %v1384
        %v1423 = vpop.f32.mrf.mxu0
        %v1424 = vadd.f32 0.0, %v1423
        %v1425 = vpop.f32.mrf.mxu0
        %v1426 = vpop.f32.mrf.mxu0
        %v1427 = vpop.f32.mrf.mxu0
        %1428 = vdwg.mxu0
        %1430 = vrot.lane.b32.xlu0 %v1424, 16
        %v1431 = vpop.permute.xlu0 %1430
        %vm1433 = vcmask 195712
        %1434 = vst.msk [vmem:[#allocation2] sm:$0xff] %vm1433, %v1431
        %1435 = vrot.lane.b32.xlu0 %v862, 104
        %v1436 = vpop.permute.xlu0 %1435
        %1437 = vrot.lane.b32.xlu0 %v928, 104
        %v1438 = vpop.permute.xlu0 %1437
        %v1439 = vsel %vm1003, %v1436, 0
        %v1441 = vsel %vm1003, %v1438, 0
        %1443 = vmatprep.subr.mxu0 0.0
        %1444 = vmatpush1.xpose.msra.mxu0 0.0
        %1445 = vmatprep.subr.mxu0 0.0
        %1446 = vmatpush1.xpose.msra.mxu0 0.0
        %1447 = vmatprep.subr.mxu0 0.0
        %1448 = vmatpush1.xpose.msra.mxu0 0.0
        %1449 = vmatprep.subr.mxu0 0.0
        %1450 = vmatpush1.xpose.msra.mxu0 0.0
        %1451 = vmatprep.subr.mxu0 0.0
        %1452 = vmatpush1.xpose.msra.mxu0 0.0
        %1453 = vmatprep.subr.mxu0 0.0
        %1454 = vmatpush1.xpose.msra.mxu0 0.0
        %1455 = vmatprep.subr.mxu0 0.0
        %1456 = vmatpush1.xpose.msra.mxu0 0.0
        %1457 = vmatprep.subr.mxu0 0.0
        %1458 = vmatpush1.xpose.msra.mxu0 0.0
        %1459 = vmatprep.subr.mxu0 0.0
        %1460 = vmatpush1.xpose.msra.mxu0 0.0
        %1461 = vmatprep.subr.mxu0 0.0
        %1462 = vmatpush1.xpose.msra.mxu0 0.0
        %1463 = vmatprep.subr.mxu0 0.0
        %1464 = vmatpush1.xpose.msra.mxu0 0.0
        %1465 = vmatprep.subr.mxu0 0.0
        %1466 = vmatpush1.xpose.msra.mxu0 0.0
        %1467 = vmatprep.subr.mxu0 0.0
        %1468 = vmatpush1.xpose.msra.mxu0 0.0
        %1469 = vmatprep.subr.mxu0 0.0
        %1470 = vmatpush1.xpose.msra.mxu0 0.0
        %1471 = vmatprep.subr.mxu0 0.0
        %1472 = vmatpush1.xpose.msra.mxu0 0.0
        %1473 = vmatprep.subr.mxu0 0.0
        %1474 = vmatpush1.xpose.msra.mxu0 %v1441
        %1475 = vmatprep.subr.mxu0 0.0
        %1476 = vmatpush2.xpose.msra.mxu0 0.0
        %1477 = vmatprep.subr.mxu0 0.0
        %1478 = vmatpush2.xpose.msra.mxu0 0.0
        %1479 = vmatprep.subr.mxu0 0.0
        %1480 = vmatpush2.xpose.msra.mxu0 0.0
        %1481 = vmatprep.subr.mxu0 0.0
        %1482 = vmatpush2.xpose.msra.mxu0 0.0
        %1483 = vmatprep.subr.mxu0 0.0
        %1484 = vmatpush2.xpose.msra.mxu0 0.0
        %1485 = vmatprep.subr.mxu0 0.0
        %1486 = vmatpush2.xpose.msra.mxu0 0.0
        %1487 = vmatprep.subr.mxu0 0.0
        %1488 = vmatpush2.xpose.msra.mxu0 0.0
        %1489 = vmatprep.subr.mxu0 0.0
        %1490 = vmatpush2.xpose.msra.mxu0 0.0
        %1491 = vmatprep.subr.mxu0 0.0
        %1492 = vmatpush2.xpose.msra.mxu0 0.0
        %1493 = vmatprep.subr.mxu0 0.0
        %1494 = vmatpush2.xpose.msra.mxu0 0.0
        %1495 = vmatprep.subr.mxu0 0.0
        %1496 = vmatpush2.xpose.msra.mxu0 0.0
        %1497 = vmatprep.subr.mxu0 0.0
        %1498 = vmatpush2.xpose.msra.mxu0 0.0
        %1499 = vmatprep.subr.mxu0 0.0
        %1500 = vmatpush2.xpose.msra.mxu0 0.0
        %1501 = vmatprep.subr.mxu0 0.0
        %1502 = vmatpush2.xpose.msra.mxu0 0.0
        %1503 = vmatprep.subr.mxu0 0.0
        %1504 = vmatpush2.xpose.msra.mxu0 0.0
        %1505 = vmatprep.subr.mxu0 0.0
        %1506 = vmatpush2.xpose.msra.mxu0 0.0
        %1507 = vmatprep.mubr.f32.mxu0 0.0
        %1508 = vmatmul.mubr.f32.gmra.mxu0 %v1439
        %v1509 = vpop.f32.mrf.mxu0
        %v1510 = vadd.f32 %v1001, %v1509
        %v1511 = vpop.f32.mrf.mxu0
        %1512 = vdwg.mxu0
        %v1513 = vsel %vm1003, %v1510, -inf
        %1514 = vmax.xlane.f32.xlu0 %v1513
        %v1515 = vpop.xlane.xlu0 %1514
        %v1516 = vsub.f32 %v1510, %v1515
        %v1517 = vmul.f32 %v1516, 1.442695
        %v1518 = vpow.pop %v1517
        %v1519 = vsel %vm1003, %v1518, 0.0
        %1520 = vadd.xlane.f32.xlu0 %v1519
        %v1521 = vpop.xlane.xlu0 %1520
        %v1522 = vrcp.pop %v1521
        %v1523 = vmul.f32 %v1518, %v1522
        %s1524 = scalar_lea.vmem %s783, 24 [#allocation16]
        %1525 = vst.msk [vmem:[%s1524] sm:$0xff] %vm1003, %v1523
        %v1526 = vpack.c.bf16 %v1523, %v1523
        %1527 = vrot.lane.b32.xlu0 %v1093, 104
        %v1528 = vpop.permute.xlu0 %1527
        %v1530 = vsel %vm1003, %v1526, 0
        %v1533 = vsel %vm1097, %v1528, 0
        %1535 = vmatprep.subr.bf16.mxu0 0
        %1536 = vmatpush1.bf16.msra.mxu0 0
        %1537 = vmatprep.subr.bf16.mxu0 0
        %1538 = vmatpush1.bf16.msra.mxu0 0
        %1539 = vmatprep.subr.bf16.mxu0 0
        %1540 = vmatpush1.bf16.msra.mxu0 0
        %1541 = vmatprep.subr.bf16.mxu0 0
        %1542 = vmatpush1.bf16.msra.mxu0 0
        %1543 = vmatprep.subr.bf16.mxu0 0
        %1544 = vmatpush1.bf16.msra.mxu0 0
        %1545 = vmatprep.subr.bf16.mxu0 0
        %1546 = vmatpush1.bf16.msra.mxu0 0
        %1547 = vmatprep.subr.bf16.mxu0 0
        %1548 = vmatpush1.bf16.msra.mxu0 0
        %1549 = vmatprep.subr.bf16.mxu0 0
        %1550 = vmatpush1.bf16.msra.mxu0 %v1533
        %1551 = vmatprep.subr.bf16.mxu0 0
        %1552 = vmatpush2.bf16.msra.mxu0 0
        %1553 = vmatprep.subr.bf16.mxu0 0
        %1554 = vmatpush2.bf16.msra.mxu0 0
        %1555 = vmatprep.subr.bf16.mxu0 0
        %1556 = vmatpush2.bf16.msra.mxu0 0
        %1557 = vmatprep.subr.bf16.mxu0 0
        %1558 = vmatpush2.bf16.msra.mxu0 0
        %1559 = vmatprep.subr.bf16.mxu0 0
        %1560 = vmatpush2.bf16.msra.mxu0 0
        %1561 = vmatprep.subr.bf16.mxu0 0
        %1562 = vmatpush2.bf16.msra.mxu0 0
        %1563 = vmatprep.subr.bf16.mxu0 0
        %1564 = vmatpush2.bf16.msra.mxu0 0
        %1565 = vmatprep.subr.bf16.mxu0 0
        %1566 = vmatpush2.bf16.msra.mxu0 0
        %1567 = vmatprep.mubr.bf16.mxu0 0
        %1568 = vmatmul.mubr.bf16.gmra.mxu0 %v1530
        %v1569 = vpop.f32.mrf.mxu0
        %v1570 = vadd.f32 0.0, %v1569
        %v1571 = vpop.f32.mrf.mxu0
        %v1572 = vpop.f32.mrf.mxu0
        %v1573 = vpop.f32.mrf.mxu0
        %1574 = vdwg.mxu0
        %1576 = vrot.lane.b32.xlu0 %v1570, 24
        %v1577 = vpop.permute.xlu0 %1576
        %vm1579 = vcmask 261312
        %1580 = vst.msk [vmem:[#allocation2] sm:$0xff] %vm1579, %v1577
        %v1581 = vld [vmem:[#allocation2] sm:$0xff]
        %v1582 = vpack.c.bf16 %v1581, %v1581
        %v1583 = vld [vmem:[%s9] sm:$0xf]
        %v1584 = vld [vmem:[%s9 + $0x4] sm:$0xf]
        %v1585 = vld [vmem:[%s9 + $0x8] sm:$0xf]
        %v1586 = vld [vmem:[%s9 + $0xc] sm:$0xf]
        %v1587 = vld [vmem:[%s10] sm:$0x1]
        %v1589 = vlaneseq
        %v1590 = vshrl.u32 %v1589, 7
        %v1591 = vsub.s32 0, %v1590
        %v1592 = vrot.slane %v1587, %v1591
        %v1598 = vunpack.c.l.b16 %v1583
        %v1599 = vunpack.c.l.b16 %v1584
        %v1600 = vunpack.c.l.b16 %v1585
        %v1601 = vunpack.c.l.b16 %v1586
        %v1602 = vpack.c.b16 %v1599, %v1598
        %v1603 = vpack.c.b16 %v1601, %v1600
        %v1607 = vsel %vm823, %v1582, 0
        %1609 = vmatprep.subr.bf16.mxu0 0
        %1610 = vmatpush1.bf16.msra.mxu0 0
        %1611 = vmatprep.subr.bf16.mxu0 0
        %1612 = vmatpush1.bf16.msra.mxu0 0
        %1613 = vmatprep.subr.bf16.mxu0 0
        %1614 = vmatpush1.bf16.msra.mxu0 0
        %1615 = vmatprep.subr.bf16.mxu0 0
        %1616 = vmatpush1.bf16.msra.mxu0 0
        %1617 = vmatprep.subr.bf16.mxu0 0
        %1618 = vmatpush1.bf16.msra.mxu0 0
        %1619 = vmatprep.subr.bf16.mxu0 0
        %1620 = vmatpush1.bf16.msra.mxu0 0
        %1621 = vmatprep.subr.bf16.mxu0 0
        %1622 = vmatpush1.bf16.msra.mxu0 %v1603
        %1623 = vmatprep.subr.bf16.mxu0 0
        %1624 = vmatpush1.bf16.msra.mxu0 %v1602
        %1625 = vmatprep.subr.bf16.mxu0 0
        %1626 = vmatpush2.bf16.msra.mxu0 0
        %1627 = vmatprep.subr.bf16.mxu0 0
        %1628 = vmatpush2.bf16.msra.mxu0 0
        %1629 = vmatprep.subr.bf16.mxu0 0
        %1630 = vmatpush2.bf16.msra.mxu0 0
        %1631 = vmatprep.subr.bf16.mxu0 0
        %1632 = vmatpush2.bf16.msra.mxu0 0
        %1633 = vmatprep.subr.bf16.mxu0 0
        %1634 = vmatpush2.bf16.msra.mxu0 0
        %1635 = vmatprep.subr.bf16.mxu0 0
        %1636 = vmatpush2.bf16.msra.mxu0 0
        %1637 = vmatprep.subr.bf16.mxu0 0
        %1638 = vmatpush2.bf16.msra.mxu0 0
        %1639 = vmatprep.subr.bf16.mxu0 0
        %1640 = vmatpush2.bf16.msra.mxu0 0
        %1641 = vmatprep.mubr.bf16.mxu0 0
        %1642 = vmatmul.mubr.bf16.gmra.mxu0 %v1607
        %v1643 = vpop.f32.mrf.mxu0
        %v1644 = vadd.f32 %v1592, %v1643
        %v1645 = vpop.f32.mrf.mxu0
        %v1646 = vpop.f32.mrf.mxu0
        %v1647 = vpop.f32.mrf.mxu0
        %1648 = vdwg.mxu0
        %v1649 = vadd.f32 %v1644, %v796
        %v1650 = vld [vmem:[%s11] sm:$0x1]
        %v1651 = vld [vmem:[%s12] sm:$0x1]
        %v1652 = vsel %vm823, %v1649, 0.0
        %1653 = vadd.xlane.f32.xlu0 %v1652
        %v1654 = vpop.xlane.xlu0 %1653
        %v1655 = vrcp.pop 32.0
        %v1656 = vmul.f32 %v1654, %v1655
        %v1657 = vsub.f32 %v1649, %v1656
        %v1658 = vmul.f32 %v1657, %v1657
        %v1659 = vsel %vm823, %v1658, 0.0
        %1660 = vadd.xlane.f32.xlu0 %v1659
        %v1661 = vpop.xlane.xlu0 %1660
        %v1662 = vmul.f32 %v1661, 0.032258064
        %v1663 = vrsqrt.pop %v1662
        %v1664 = vmul.f32 %v1662, %v1663
        %vm1665 = vcmp.eq.f32.partialorder %v1662, inf
        %v1666 = vsel %vm1665, %v1662, %v1664
        %vm1667 = vcmp.eq.f32.partialorder %v1662, 0.0
        %v1668 = vand.u32 %v1662, 2147483648
        %v1669 = vsel %vm1667, %v1668, %v1666
        %v1670 = vadd.f32 %v1669, 1e-06
        %v1671 = vrcp.pop %v1670
        %v1672 = vmul.f32 %v1657, %v1671
        %v1674 = vlaneseq
        %v1675 = vshrl.u32 %v1674, 7
        %v1676 = vsub.s32 0, %v1675
        %v1677 = vrot.slane %v1650, %v1676
        %v1679 = vmul.f32 %v1677, %v1672
        %v1681 = vlaneseq
        %v1682 = vshrl.u32 %v1681, 7
        %v1683 = vsub.s32 0, %v1682
        %v1684 = vrot.slane %v1651, %v1683
        %v1686 = vadd.f32 %v1679, %v1684
        %v1687 = vld [vmem:[%s13] sm:$0x1]
        %v1688 = vld [vmem:[%s14] sm:$0x1]
        %v1689 = vsel %vm823, %v1686, 0.0
        %1690 = vadd.xlane.f32.xlu0 %v1689
        %v1691 = vpop.xlane.xlu0 %1690
        %v1692 = vmul.f32 %v1691, %v1655
        %v1693 = vsub.f32 %v1686, %v1692
        %v1694 = vmul.f32 %v1693, %v1693
        %v1695 = vsel %vm823, %v1694, 0.0
        %1696 = vadd.xlane.f32.xlu0 %v1695
        %v1697 = vpop.xlane.xlu0 %1696
        %v1698 = vmul.f32 %v1697, 0.032258064
        %v1699 = vrsqrt.pop %v1698
        %v1700 = vmul.f32 %v1698, %v1699
        %vm1701 = vcmp.eq.f32.partialorder %v1698, inf
        %v1702 = vsel %vm1701, %v1698, %v1700
        %vm1703 = vcmp.eq.f32.partialorder %v1698, 0.0
        %v1704 = vand.u32 %v1698, 2147483648
        %v1705 = vsel %vm1703, %v1704, %v1702
        %v1706 = vadd.f32 %v1705, 1e-06
        %v1707 = vrcp.pop %v1706
        %v1708 = vmul.f32 %v1693, %v1707
        %v1710 = vlaneseq
        %v1711 = vshrl.u32 %v1710, 7
        %v1712 = vsub.s32 0, %v1711
        %v1713 = vrot.slane %v1687, %v1712
        %v1715 = vmul.f32 %v1713, %v1708
        %v1717 = vlaneseq
        %v1718 = vshrl.u32 %v1717, 7
        %v1719 = vsub.s32 0, %v1718
        %v1720 = vrot.slane %v1688, %v1719
        %v1722 = vadd.f32 %v1715, %v1720
        %v1723 = vpack.c.bf16 %v1722, %v1722
        %v1724 = vld [vmem:[#allocation14] sm:$0xf]
        %v1725 = vld [vmem:[#allocation14 + $0x4] sm:$0xf]
        %v1726 = vld [vmem:[#allocation14 + $0x8] sm:$0xf]
        %v1727 = vld [vmem:[#allocation14 + $0xc] sm:$0xf]
        %v1728 = vld [vmem:[%s16] sm:$0x1]
        %v1730 = vlaneseq
        %v1731 = vshrl.u32 %v1730, 7
        %v1732 = vsub.s32 0, %v1731
        %v1733 = vrot.slane %v1728, %v1732
        %v1739 = vunpack.c.l.b16 %v1724
        %v1740 = vunpack.c.l.b16 %v1725
        %v1741 = vunpack.c.l.b16 %v1726
        %v1742 = vunpack.c.l.b16 %v1727
        %v1743 = vpack.c.b16 %v1740, %v1739
        %v1744 = vpack.c.b16 %v1742, %v1741
        %v1748 = vsel %vm823, %v1723, 0
        %1750 = vmatprep.subr.bf16.mxu0 0
        %1751 = vmatpush1.bf16.msra.mxu0 0
        %1752 = vmatprep.subr.bf16.mxu0 0
        %1753 = vmatpush1.bf16.msra.mxu0 0
        %1754 = vmatprep.subr.bf16.mxu0 0
        %1755 = vmatpush1.bf16.msra.mxu0 0
        %1756 = vmatprep.subr.bf16.mxu0 0
        %1757 = vmatpush1.bf16.msra.mxu0 0
        %1758 = vmatprep.subr.bf16.mxu0 0
        %1759 = vmatpush1.bf16.msra.mxu0 0
        %1760 = vmatprep.subr.bf16.mxu0 0
        %1761 = vmatpush1.bf16.msra.mxu0 0
        %1762 = vmatprep.subr.bf16.mxu0 0
        %1763 = vmatpush1.bf16.msra.mxu0 %v1744
        %1764 = vmatprep.subr.bf16.mxu0 0
        %1765 = vmatpush1.bf16.msra.mxu0 %v1743
        %1766 = vmatprep.subr.bf16.mxu0 0
        %1767 = vmatpush2.bf16.msra.mxu0 0
        %1768 = vmatprep.subr.bf16.mxu0 0
        %1769 = vmatpush2.bf16.msra.mxu0 0
        %1770 = vmatprep.subr.bf16.mxu0 0
        %1771 = vmatpush2.bf16.msra.mxu0 0
        %1772 = vmatprep.subr.bf16.mxu0 0
        %1773 = vmatpush2.bf16.msra.mxu0 0
        %1774 = vmatprep.subr.bf16.mxu0 0
        %1775 = vmatpush2.bf16.msra.mxu0 0
        %1776 = vmatprep.subr.bf16.mxu0 0
        %1777 = vmatpush2.bf16.msra.mxu0 0
        %1778 = vmatprep.subr.bf16.mxu0 0
        %1779 = vmatpush2.bf16.msra.mxu0 0
        %1780 = vmatprep.subr.bf16.mxu0 0
        %1781 = vmatpush2.bf16.msra.mxu0 0
        %1782 = vmatprep.mubr.bf16.mxu0 0
        %1783 = vmatmul.mubr.bf16.gmra.mxu0 %v1748
        %v1784 = vpop.f32.mrf.mxu0
        %v1785 = vadd.f32 %v1733, %v1784
        %v1786 = vpop.f32.mrf.mxu0
        %v1787 = vpop.f32.mrf.mxu0
        %v1788 = vpop.f32.mrf.mxu0
        %1789 = vdwg.mxu0
        %v1790 = vmax.f32 %v1785, 0.0
        %v1791 = vpack.c.bf16 %v1790, %v1790
        %v1792 = vld [vmem:[%s17] sm:$0xf]
        %v1793 = vld [vmem:[%s17 + $0x4] sm:$0xf]
        %v1794 = vld [vmem:[%s17 + $0x8] sm:$0xf]
        %v1795 = vld [vmem:[%s17 + $0xc] sm:$0xf]
        %v1796 = vld [vmem:[%s17 + $0x10] sm:$0xf]
        %v1797 = vld [vmem:[%s17 + $0x14] sm:$0xf]
        %v1798 = vld [vmem:[%s17 + $0x18] sm:$0xf]
        %v1799 = vld [vmem:[%s17 + $0x1c] sm:$0xf]
        %v1800 = vld [vmem:[%s18] sm:$0x1]
        %v1802 = vlaneseq
        %v1803 = vshrl.u32 %v1802, 7
        %v1804 = vsub.s32 0, %v1803
        %v1805 = vrot.slane %v1800, %v1804
        %v1815 = vunpack.c.l.b16 %v1792
        %v1816 = vunpack.c.l.b16 %v1793
        %v1817 = vunpack.c.l.b16 %v1794
        %v1818 = vunpack.c.l.b16 %v1795
        %v1819 = vunpack.c.l.b16 %v1796
        %v1820 = vunpack.c.l.b16 %v1797
        %v1821 = vunpack.c.l.b16 %v1798
        %v1822 = vunpack.c.l.b16 %v1799
        %v1823 = vpack.c.b16 %v1816, %v1815
        %v1824 = vpack.c.b16 %v1818, %v1817
        %v1825 = vpack.c.b16 %v1820, %v1819
        %v1826 = vpack.c.b16 %v1822, %v1821
        %vm1831 = vcmask 523264
        %v1833 = vsel %vm1831, %v1791, 0
        %1835 = vmatprep.subr.bf16.mxu0 0
        %1836 = vmatpush1.bf16.msra.mxu0 0
        %1837 = vmatprep.subr.bf16.mxu0 0
        %1838 = vmatpush1.bf16.msra.mxu0 0
        %1839 = vmatprep.subr.bf16.mxu0 0
        %1840 = vmatpush1.bf16.msra.mxu0 0
        %1841 = vmatprep.subr.bf16.mxu0 0
        %1842 = vmatpush1.bf16.msra.mxu0 0
        %1843 = vmatprep.subr.bf16.mxu0 0
        %1844 = vmatpush1.bf16.msra.mxu0 %v1826
        %1845 = vmatprep.subr.bf16.mxu0 0
        %1846 = vmatpush1.bf16.msra.mxu0 %v1825
        %1847 = vmatprep.subr.bf16.mxu0 0
        %1848 = vmatpush1.bf16.msra.mxu0 %v1824
        %1849 = vmatprep.subr.bf16.mxu0 0
        %1850 = vmatpush1.bf16.msra.mxu0 %v1823
        %1851 = vmatprep.subr.bf16.mxu0 0
        %1852 = vmatpush2.bf16.msra.mxu0 0
        %1853 = vmatprep.subr.bf16.mxu0 0
        %1854 = vmatpush2.bf16.msra.mxu0 0
        %1855 = vmatprep.subr.bf16.mxu0 0
        %1856 = vmatpush2.bf16.msra.mxu0 0
        %1857 = vmatprep.subr.bf16.mxu0 0
        %1858 = vmatpush2.bf16.msra.mxu0 0
        %1859 = vmatprep.subr.bf16.mxu0 0
        %1860 = vmatpush2.bf16.msra.mxu0 0
        %1861 = vmatprep.subr.bf16.mxu0 0
        %1862 = vmatpush2.bf16.msra.mxu0 0
        %1863 = vmatprep.subr.bf16.mxu0 0
        %1864 = vmatpush2.bf16.msra.mxu0 0
        %1865 = vmatprep.subr.bf16.mxu0 0
        %1866 = vmatpush2.bf16.msra.mxu0 0
        %1867 = vmatprep.mubr.bf16.mxu0 0
        %1868 = vmatmul.mubr.bf16.gmra.mxu0 %v1833
        %v1869 = vpop.f32.mrf.mxu0
        %v1870 = vadd.f32 %v1805, %v1869
        %v1871 = vpop.f32.mrf.mxu0
        %v1872 = vpop.f32.mrf.mxu0
        %v1873 = vpop.f32.mrf.mxu0
        %1874 = vdwg.mxu0
        %v1875 = vadd.f32 %v1870, %v1686
        %1876 = vst.msk [vmem:[%s776] sm:$0xff] %vm823, %v1875
        %s1877 = sand.u32 %s482, 1
        %s1878 = scalar_lea.sflag [#allocation5], %s1877
        %s1879 = sand.u32 %s482, 1
        %s1880 = smul.addr %s1879, 8
        %s1881 = scalar_lea.vmem [#allocation15], %s1880
        %s1882 = sand.u32 %s510, 1
        %s1883 = scalar_lea.sflag [#allocation17], %s1882
        %s1884 = sand.u32 %s510, 1
        %s1885 = smul.addr %s1884, 32
        %s1886 = scalar_lea.vmem [#allocation16], %s1885
        // Predicated region
        $region125: #{tpu_custom_call.1} parent=95 // pred_check
          %p1887 = pneg %p492
        $region126: #{tpu_custom_call.1} parent=95 // pred_check_branch
          %1889 = sbr.rel (%p1887) target = $region128
        $region127: #{tpu_custom_call.1} parent=95 // pred_region
          %s1891 = ssub.s32 128, 128
          %1892 = vsyncadd %s1878, %s1891
          %s1893 = sadd.s32 %s49, %s48
          %s1894 = smul.addr %s1893, 128
          %s1895 = scalar_lea.hbm %s19, %s1894
          %s1897 = sshll.u32 %s1881, 4
          %s1898 = int_to_ptr.vmem [resolvable:$true] %s1897
          %1900 = dma.vmem_to_hbm [thread:$0]  %s1898, 128, %s1895, %s1878
        $region128: #{tpu_custom_call.1} parent=95 // pred_fallthru
          _
        // Predicated region
        $region129: #{tpu_custom_call.1} parent=95 // pred_check
          %p1901 = pneg %p520
        $region130: #{tpu_custom_call.1} parent=95 // pred_check_branch
          %1903 = sbr.rel (%p1901) target = $region132
        $region131: #{tpu_custom_call.1} parent=95 // pred_region
          %s1905 = ssub.s32 512, 512
          %1906 = vsyncadd %s1883, %s1905
          %s1907 = smul.addr %s48, 4
          %s1908 = sadd.s32 %s49, %s1907
          %s1909 = smul.addr %s1908, 128
          %s1910 = scalar_lea.hbm %s20, %s1909
          %s1911 = sshll.u32 %s1886, 4
          %s1912 = int_to_ptr.vmem [resolvable:$true] %s1911
          %1917 = dma.vmem_to_hbm [thread:$0]  %s1912, 512, %s1910, %s1883, 128, 128, 8
        $region132: #{tpu_custom_call.1} parent=95 // pred_fallthru
          _
      $region96: #{tpu_custom_call.1} parent=5 // pred_fallthru
        _
      %p1918 = scmp.le.s32.totalorder 2, %s39
      // Predicated region
      $region133: #{tpu_custom_call.1} parent=5 // pred_check
        %p1919 = pneg %p1918
      $region134: #{tpu_custom_call.1} parent=5 // pred_check_branch
        %1921 = sbr.rel (%p1919) target = $region136
      $region135: #{tpu_custom_call.1} parent=5 // pred_region
        %s1922 = ssub.s32 %s39, 2
        // Predicated region
        $region137: #{tpu_custom_call.1} parent=135 // pred_check
          %p1923 = pneg %p498
        $region138: #{tpu_custom_call.1} parent=135 // pred_check_branch
          %1925 = sbr.rel (%p1923) target = $region140
        $region139: #{tpu_custom_call.1} parent=135 // pred_region
          %s1926 = sand.u32 %s483, 1
          %s1927 = scalar_lea.sflag [#allocation5], %s1926
          %s1928 = sand.u32 %s483, 1
          %s1929 = smul.addr %s1928, 8
          %s1930 = scalar_lea.vmem [#allocation15], %s1929
          %1931 = dma.done %s1927, 128
        $region140: #{tpu_custom_call.1} parent=135 // pred_fallthru
          _
        // Predicated region
        $region141: #{tpu_custom_call.1} parent=135 // pred_check
          %p1932 = pneg %p526
        $region142: #{tpu_custom_call.1} parent=135 // pred_check_branch
          %1934 = sbr.rel (%p1932) target = $region144
        $region143: #{tpu_custom_call.1} parent=135 // pred_region
          %s1935 = sand.u32 %s511, 1
          %s1936 = scalar_lea.sflag [#allocation17], %s1935
          %s1937 = sand.u32 %s511, 1
          %s1938 = smul.addr %s1937, 32
          %s1939 = scalar_lea.vmem [#allocation16], %s1938
          %1940 = dma.done %s1936, 512
        $region144: #{tpu_custom_call.1} parent=135 // pred_fallthru
          _
      $region136: #{tpu_custom_call.1} parent=5 // pred_fallthru
        _
    $region6: #{tpu_custom_call.1} parent=1 // loop_footer
      %s43 = sadd.s32 1, %s39
    $region7: #{tpu_custom_call.1} parent=1 // loop_footer_branch
      %38 = sbr.rel target = $region3
    $region8: #{tpu_custom_call.1} parent=1 // loop_exit
      _
    %1941 = vsyncpa [#allocation4], 1
    %s1942 = scalar_lea.sflag [#allocation4], 1
    %1943 = vsyncpa %s1942, 1
    %1944 = vsyncpa [#allocation7], 1
    %1945 = vsyncpa [#allocation10], 1
    %1946 = vsyncpa [#allocation13], 1
    %1947 = vsyncpa [#allocation5], 1
    %s1948 = scalar_lea.sflag [#allocation5], 1
    %1949 = vsyncpa %s1948, 1
    %1950 = vsyncpa [#allocation17], 1
    %s1951 = scalar_lea.sflag [#allocation17], 1
    %1952 = vsyncpa %s1951, 1

</llo_original>
